<compile_context>
chip_gen: v7x
topology: tpu7x:2x2x1
jax: 0.10.0
libtpu: 0.0.40
codegen_flags: <defaults>
</compile_context>

<pallas_src>
import functools

import jax
import jax.numpy as jnp
from jax.experimental import pallas as pl
from jax.experimental.pallas import tpu as pltpu

LN_EPS = 1e-5          # pyg LayerNorm(mode='node') == F.layer_norm, eps=1e-5
NEG_SLOPE = 0.2        # GATv2Conv default negative_slope
INV_SQRT2 = 0.7071067811865476
MASK_NEG = 1e30        # additive bias for non-edges (f32 sentinel)
LANE = 128


def _gelu_exact(x):
    # nn.GELU() default ('none') = exact erf-based GELU
    return 0.5 * x * (1.0 + jax.lax.erf(x * jnp.float32(INV_SQRT2)))


def _pad_lanes(k):
    return ((k + LANE - 1) // LANE) * LANE


# ----------------------------- Pallas kernel ------------------------------- #

def gnn_fused_kernel(params_ref, data_ref, o_ref, *, num_layers, heads, dim):
    """Whole GNN: L x [LN -> GATv2 -> GELU -> residual] -> Linear, fused."""
    n = o_ref.shape[0]
    hd = heads * dim
    phd = _pad_lanes(hd)                       # 128-lane padded per-projection width
    inv_heads = jnp.float32(1.0 / heads)

    # slab row offsets (must match pack_gnn_inputs)
    vec0 = num_layers * dim                    # per-layer vector block start
    pw0 = vec0 + 8 * num_layers                # post_mp weight start
    pb0 = pw0 + dim                            # post_mp bias start

    # node features + head-tiled additive adjacency bias, loaded once
    x = data_ref[0:n, 0:dim]                   # [N, D]
    adj_both = data_ref[n:n + heads * n, 0:n]  # [H*N, N], 0 (edge) / -1e30

    for l in range(num_layers):                # static unroll over layers
        w_lr = params_ref[l * dim:(l + 1) * dim, :]          # [D, 2*phd]
        v = params_ref[vec0 + l * 8: vec0 + l * 8 + 8, :]    # [8, 2*phd]
        ln_w = v[0:1, 0:dim]                                  # [1, D]
        ln_b = v[1:2, 0:dim]                                  # [1, D]
        b_lr = v[2:3, :]                                      # [1, 2*phd]
        gat_b = v[3:4, 0:dim]                                 # [1, D]
        attv = v[4:5, 0:phd].reshape(1, 1, phd)               # att          (padded 0)
        attv_ns = v[5:6, 0:phd].reshape(1, 1, phd)            # 0.2*att      (padded 0)

        # --- LayerNorm (mode='node') ---
        mean = jnp.mean(x, axis=-1, keepdims=True)
        xc = x - mean
        var = jnp.mean(xc * xc, axis=-1, keepdims=True)
        xn = xc * jax.lax.rsqrt(var + LN_EPS) * ln_w + ln_b

        # --- fused, lane-tile-aligned GATv2 projections ---
        xlr = jnp.dot(xn, w_lr, preferred_element_type=jnp.float32) + b_lr
        xl = xlr[:, :phd]                       # [N, 128]  source feats (lanes >=hd are 0)
        xr = xlr[:, phd:]                       # [N, 128]  target feats

        # e_w[i,j,:] = leaky_relu(xr[i]+xl[j]) * att  -- one select, one mul
        e_raw = xr[:, None, :] + xl[None, :, :]             # [N, N, 128]
        gate = jnp.where(e_raw > 0, attv, attv_ns)
        e_w = e_raw * gate                                   # padded lanes stay 0

        # --- per-head logits stacked on sublanes -> single softmax chain ---
        s_parts = [jnp.sum(e_w[:, :, h * dim:(h + 1) * dim], axis=-1)
                   for h in range(heads)]                    # heads x [N, N]
        s_both = jnp.concatenate(s_parts, axis=0) + adj_both  # [H*N, N]
        m = jnp.max(s_both, axis=-1, keepdims=True)
        p = jnp.exp(s_both - m)                              # masked entries underflow to 0
        den = jnp.sum(p, axis=-1, keepdims=True)
        inv = pl.reciprocal(den, approx=True)                # EUP reciprocal
        inv = inv * (2.0 - den * inv)                        # one Newton step
        alpha = p * (inv * inv_heads)                        # 1/heads folded in

        # --- single aggregation matmul, pick per-head diagonal blocks ---
        r = jnp.dot(alpha, xl, preferred_element_type=jnp.float32)   # [H*N, 128]
        acc = r[0:n, 0:dim]
        for h in range(1, heads):
            acc = acc + r[h * n:(h + 1) * n, h * dim:(h + 1) * dim]

        out = _gelu_exact(acc + gat_b)          # concat=False -> head mean + bias, GELU
        x = out + x                             # residual connection

    # --- post_mp Linear (weights live in the same slab) ---
    pw = params_ref[pw0:pw0 + dim, :]           # [D, 2*phd], real cols 0:D
    pb = params_ref[pb0:pb0 + 1, :]             # [1, 2*phd], real cols 0:D
    y = jnp.dot(x, pw, preferred_element_type=jnp.float32) + pb
    o_ref[...] = y[:, 0:dim].astype(o_ref.dtype)


# ------------------------------ JAX wrappers -------------------------------- #

def pack_gnn_inputs(emb, adj_mask, layer_params, post_params, heads, dim):
    """Pack all parameters into one [R, 2*phd] slab and features+mask into one data slab."""
    n = emb.shape[0]
    hd = heads * dim
    phd = _pad_lanes(hd)
    num_layers = len(layer_params)
    vec0 = num_layers * dim
    pw0 = vec0 + 8 * num_layers
    pb0 = pw0 + dim
    rows = pb0 + 8

    params = jnp.zeros((rows, 2 * phd), jnp.float32)
    for l, (ln_w, ln_b, wl, bl, wr, br, att, gatb) in enumerate(layer_params):
        params = params.at[l * dim:(l + 1) * dim, 0:hd].set(wl)
        params = params.at[l * dim:(l + 1) * dim, phd:phd + hd].set(wr)
        r0 = vec0 + l * 8
        params = params.at[r0 + 0, 0:dim].set(ln_w.reshape(-1))
        params = params.at[r0 + 1, 0:dim].set(ln_b.reshape(-1))
        params = params.at[r0 + 2, 0:hd].set(bl.reshape(-1))
        params = params.at[r0 + 2, phd:phd + hd].set(br.reshape(-1))
        params = params.at[r0 + 3, 0:dim].set(gatb.reshape(-1))
        params = params.at[r0 + 4, 0:hd].set(att.reshape(-1))
        params = params.at[r0 + 5, 0:hd].set(NEG_SLOPE * att.reshape(-1))
    w_post, b_post = post_params
    params = params.at[pw0:pw0 + dim, 0:dim].set(w_post)
    params = params.at[pb0, 0:dim].set(b_post.reshape(-1))

    # data slab: node features + head-tiled additive adjacency bias
    width = max(dim, n)
    adj_bias = (adj_mask.astype(jnp.float32) - 1.0) * jnp.float32(MASK_NEG)
    adj_both = jnp.tile(adj_bias, (heads, 1))                 # [H*N, N]
    data = jnp.zeros((n + heads * n, width), jnp.float32)
    data = data.at[0:n, 0:dim].set(emb)
    data = data.at[n:n + heads * n, 0:n].set(adj_both)
    return params, data


def gnn_forward(x, edge_index, emb_weight, layer_params, post_params, adj_mask,
                *, heads, dim, cond_emb=None):
    # GNN.forward ignores `x` and uses self.emb.weight (+ optional cond_emb).
    del x, edge_index                                 # graph encoded in adj_mask
    h0 = emb_weight if cond_emb is None else emb_weight + cond_emb
    n = h0.shape[0]
    # GATv2Conv(add_self_loops=True): force self loops here so the additive
    # -1e30 masking never sees an all-masked softmax row.
    idx = jnp.arange(n)
    adj_mask = adj_mask.at[idx, idx].set(1.0)

    params, data = pack_gnn_inputs(h0, adj_mask, layer_params, post_params, heads, dim)

    num_layers = len(layer_params)
    phd = _pad_lanes(heads * dim)
    # advisory cost hint so XLA can schedule surrounding ops sensibly
    flops = (num_layers * (2 * n * dim * 2 * phd          # projections
                           + 6 * n * n * phd              # e-tensor passes
                           + 2 * (heads * n) * n * phd)   # aggregation matmul
             + 2 * n * dim * 2 * phd)                     # post_mp
    transcendentals = num_layers * (heads * n * n + n * dim + heads * n) + n * dim
    bytes_accessed = int(params.size * 4 + data.size * 4 + n * dim * 4)

    kernel = functools.partial(gnn_fused_kernel, num_layers=num_layers,
                               heads=heads, dim=dim)
    vmem = pl.BlockSpec(memory_space=pltpu.MemorySpace.VMEM)
    return pl.pallas_call(
        kernel,
        out_shape=jax.ShapeDtypeStruct((n, dim), jnp.float32),
        in_specs=[vmem, vmem],
        out_specs=vmem,
        cost_estimate=pl.CostEstimate(flops=flops,
                                      transcendentals=transcendentals,
                                      bytes_accessed=bytes_accessed),
    )(params, data)


# ----------------------------- pure-JAX reference --------------------------- #

def gnn_forward_ref(emb_weight, adj_mask, layer_params, post_params, heads, dim):
    n = emb_weight.shape[0]
    idx = jnp.arange(n)
    adj_mask = adj_mask.at[idx, idx].set(1.0)          # add_self_loops=True
    x = emb_weight
    for (ln_w, ln_b, wl, bl, wr, br, att, gatb) in layer_params:
        mean = jnp.mean(x, -1, keepdims=True)
        xc = x - mean
        var = jnp.mean(xc * xc, -1, keepdims=True)
        xn = xc / jnp.sqrt(var + LN_EPS) * ln_w + ln_b
        xl = xn @ wl + bl
        xr = xn @ wr + br
        acc = jnp.zeros_like(x)
        for h in range(heads):
            xl_h = xl[:, h * dim:(h + 1) * dim]
            xr_h = xr[:, h * dim:(h + 1) * dim]
            e = xr_h[:, None, :] + xl_h[None, :, :]
            e = jnp.where(e > 0, e, NEG_SLOPE * e)
            s = jnp.sum(e * att[h][None, None, :], -1)
            s = jnp.where(adj_mask > 0, s, -MASK_NEG)
            s = s - jnp.max(s, -1, keepdims=True)
            p = jnp.exp(s) * adj_mask
            alpha = p / jnp.sum(p, -1, keepdims=True)
            acc = acc + alpha @ xl_h
        out = acc / heads + gatb
        out = _gelu_exact(out)
        x = out + x
    w_post, b_post = post_params
    return x @ w_post + b_post


# --------------------------------- main ------------------------------------- #

if __name__ == "__main__":
    N, D, H, L, E = 16, 32, 2, 2, 40   # num_embs, dim, heads, num_layers, edges

    key = jax.random.PRNGKey(0)
    ks = jax.random.split(key, 8)

    # embedding table (node features); GNN.forward uses emb.weight directly
    emb_weight = 0.5 * jax.random.normal(ks[0], (N, D), jnp.float32)

    # random edge set; dense mask[dst, src] = 1 (self loops added by the wrapper)
    src = jax.random.randint(ks[1], (E,), 0, N)
    dst = jax.random.randint(ks[2], (E,), 0, N)
    edge_index = jnp.stack([src, dst])
    adj_mask = jnp.zeros((N, N), jnp.float32).at[dst, src].set(1.0)

    # deterministic synthetic parameters
    layer_keys = iter(jax.random.split(ks[3], 8 * L))
    layer_params = []
    for _ in range(L):
        ln_w = 1.0 + 0.1 * jax.random.normal(next(layer_keys), (1, D), jnp.float32)
        ln_b = 0.1 * jax.random.normal(next(layer_keys), (1, D), jnp.float32)
        wl = 0.2 * jax.random.normal(next(layer_keys), (D, H * D), jnp.float32)
        bl = 0.1 * jax.random.normal(next(layer_keys), (1, H * D), jnp.float32)
        wr = 0.2 * jax.random.normal(next(layer_keys), (D, H * D), jnp.float32)
        br = 0.1 * jax.random.normal(next(layer_keys), (1, H * D), jnp.float32)
        att = 0.2 * jax.random.normal(next(layer_keys), (H, D), jnp.float32)
        gatb = 0.1 * jax.random.normal(next(layer_keys), (1, D), jnp.float32)
        layer_params.append((ln_w, ln_b, wl, bl, wr, br, att, gatb))
    w_post = 0.2 * jax.random.normal(ks[4], (D, D), jnp.float32)
    b_post = 0.1 * jax.random.normal(ks[5], (1, D), jnp.float32)
    post_params = (w_post, b_post)

    # the forward's `x` argument is ignored by the module; kept for signature parity
    x_in = jax.random.normal(ks[6], (N, D), jnp.float32)

    out = gnn_forward(x_in, edge_index, emb_weight, layer_params, post_params,
                      adj_mask, heads=H, dim=D)
    out = jax.block_until_ready(out)

    ref = gnn_forward_ref(emb_weight, adj_mask, layer_params, post_params, H, D)
    err = float(jnp.max(jnp.abs(out - ref)))
    assert out.shape == (N, D) and jnp.isfinite(out).all(), "bad output"
    assert err < 1e-3, f"mismatch vs reference: {err}"
    print("KERNEL_OK")
</pallas_src>

<mosaic_0001>
module attributes {stable_mosaic.version = 11 : i64} {
  func.func @gnn_fused_kernel(%arg0: memref<120x256xf32, #tpu.memory_space<vmem>>, %arg1: memref<48x32xf32, #tpu.memory_space<vmem>>, %arg2: memref<16x32xf32, #tpu.memory_space<vmem>>) attributes {dimension_semantics = [], scalar_prefetch = 0 : i64, scratch_operands = 0 : i64, tpu.core_type = #tpu.core_type<tc>} {
    %c0 = arith.constant 0 : index
    %c0_0 = arith.constant 0 : index
    %0 = vector.load %arg1[%c0, %c0_0] : memref<48x32xf32, #tpu.memory_space<vmem>>, vector<16x32xf32>
    %c16 = arith.constant 16 : index
    %c0_1 = arith.constant 0 : index
    %1 = vector.load %arg1[%c16, %c0_1] : memref<48x32xf32, #tpu.memory_space<vmem>>, vector<32x16xf32>
    %c0_2 = arith.constant 0 : index
    %c0_3 = arith.constant 0 : index
    %2 = vector.load %arg0[%c0_2, %c0_3] : memref<120x256xf32, #tpu.memory_space<vmem>>, vector<32x256xf32>
    %c64 = arith.constant 64 : index
    %c0_4 = arith.constant 0 : index
    %3 = vector.load %arg0[%c64, %c0_4] : memref<120x256xf32, #tpu.memory_space<vmem>>, vector<8x256xf32>
    %4 = vector.extract_strided_slice %3 {offsets = [0, 0], sizes = [1, 32], strides = [1, 1]} : vector<8x256xf32> to vector<1x32xf32>
    %5 = vector.extract_strided_slice %3 {offsets = [1, 0], sizes = [1, 32], strides = [1, 1]} : vector<8x256xf32> to vector<1x32xf32>
    %6 = vector.extract_strided_slice %3 {offsets = [2, 0], sizes = [1, 256], strides = [1, 1]} : vector<8x256xf32> to vector<1x256xf32>
    %7 = vector.extract_strided_slice %3 {offsets = [3, 0], sizes = [1, 32], strides = [1, 1]} : vector<8x256xf32> to vector<1x32xf32>
    %8 = vector.extract_strided_slice %3 {offsets = [4, 0], sizes = [1, 128], strides = [1, 1]} : vector<8x256xf32> to vector<1x128xf32>
    %9 = vector.shape_cast %8 : vector<1x128xf32> to vector<1x1x128xf32>
    %10 = vector.extract_strided_slice %3 {offsets = [5, 0], sizes = [1, 128], strides = [1, 1]} : vector<8x256xf32> to vector<1x128xf32>
    %11 = vector.shape_cast %10 : vector<1x128xf32> to vector<1x1x128xf32>
    %cst = arith.constant dense<0.000000e+00> : vector<16xf32>
    %12 = vector.multi_reduction <add>, %0, %cst [1] : vector<16x32xf32> to vector<16xf32>
    %13 = vector.shape_cast %12 : vector<16xf32> to vector<16x1xf32>
    %cst_5 = arith.constant 3.200000e+01 : f32
    %14 = vector.broadcast %cst_5 : f32 to vector<16x1xf32>
    %15 = arith.divf %13, %14 : vector<16x1xf32>
    %16 = vector.broadcast %15 : vector<16x1xf32> to vector<16x32xf32>
    %17 = arith.subf %0, %16 : vector<16x32xf32>
    %18 = arith.mulf %17, %17 : vector<16x32xf32>
    %cst_6 = arith.constant dense<0.000000e+00> : vector<16xf32>
    %19 = vector.multi_reduction <add>, %18, %cst_6 [1] : vector<16x32xf32> to vector<16xf32>
    %20 = vector.shape_cast %19 : vector<16xf32> to vector<16x1xf32>
    %cst_7 = arith.constant 3.200000e+01 : f32
    %21 = vector.broadcast %cst_7 : f32 to vector<16x1xf32>
    %22 = arith.divf %20, %21 : vector<16x1xf32>
    %cst_8 = arith.constant 9.99999974E-6 : f32
    %23 = vector.broadcast %cst_8 : f32 to vector<16x1xf32>
    %24 = arith.addf %22, %23 : vector<16x1xf32>
    %25 = math.rsqrt %24 : vector<16x1xf32>
    %26 = vector.broadcast %25 : vector<16x1xf32> to vector<16x32xf32>
    %27 = arith.mulf %17, %26 : vector<16x32xf32>
    %28 = vector.broadcast %4 : vector<1x32xf32> to vector<16x32xf32>
    %29 = arith.mulf %27, %28 : vector<16x32xf32>
    %30 = vector.broadcast %5 : vector<1x32xf32> to vector<16x32xf32>
    %31 = arith.addf %29, %30 : vector<16x32xf32>
    %cst_9 = arith.constant dense<0.000000e+00> : vector<16x256xf32>
    %32 = tpu.matmul %31, %2, %cst_9 {dimension_numbers = #tpu.dot_dimension_numbers<[1], [0], [0], [1], [0, 0, 1, 1], [], []>} : vector<16x32xf32>, vector<32x256xf32>, vector<16x256xf32> -> vector<16x256xf32>
    %33 = vector.broadcast %6 : vector<1x256xf32> to vector<16x256xf32>
    %34 = arith.addf %32, %33 : vector<16x256xf32>
    %35 = vector.extract_strided_slice %34 {offsets = [0, 0], sizes = [16, 128], strides = [1, 1]} : vector<16x256xf32> to vector<16x128xf32>
    %36 = vector.extract_strided_slice %34 {offsets = [0, 128], sizes = [16, 128], strides = [1, 1]} : vector<16x256xf32> to vector<16x128xf32>
    %37 = vector.shape_cast %36 : vector<16x128xf32> to vector<16x1x128xf32>
    %38 = vector.shape_cast %35 : vector<16x128xf32> to vector<1x16x128xf32>
    %39 = vector.broadcast %37 : vector<16x1x128xf32> to vector<16x16x128xf32>
    %40 = vector.broadcast %38 : vector<1x16x128xf32> to vector<16x16x128xf32>
    %41 = arith.addf %39, %40 : vector<16x16x128xf32>
    %cst_10 = arith.constant 0.000000e+00 : f32
    %42 = vector.broadcast %cst_10 : f32 to vector<16x16x128xf32>
    %43 = arith.cmpf ogt, %41, %42 : vector<16x16x128xf32>
    %44 = vector.shape_cast %9 : vector<1x1x128xf32> to vector<1x1x128xf32>
    %45 = vector.broadcast %44 : vector<1x1x128xf32> to vector<16x16x128xf32>
    %46 = vector.shape_cast %11 : vector<1x1x128xf32> to vector<1x1x128xf32>
    %47 = vector.broadcast %46 : vector<1x1x128xf32> to vector<16x16x128xf32>
    %48 = arith.select %43, %45, %47 : vector<16x16x128xi1>, vector<16x16x128xf32>
    %49 = arith.mulf %41, %48 : vector<16x16x128xf32>
    %50 = vector.extract_strided_slice %49 {offsets = [0, 0, 0], sizes = [16, 16, 32], strides = [1, 1, 1]} : vector<16x16x128xf32> to vector<16x16x32xf32>
    %cst_11 = arith.constant dense<0.000000e+00> : vector<16x16xf32>
    %51 = vector.multi_reduction <add>, %50, %cst_11 [2] : vector<16x16x32xf32> to vector<16x16xf32>
    %52 = vector.extract_strided_slice %49 {offsets = [0, 0, 32], sizes = [16, 16, 32], strides = [1, 1, 1]} : vector<16x16x128xf32> to vector<16x16x32xf32>
    %cst_12 = arith.constant dense<0.000000e+00> : vector<16x16xf32>
    %53 = vector.multi_reduction <add>, %52, %cst_12 [2] : vector<16x16x32xf32> to vector<16x16xf32>
    %54 = tpu.concatenate %51, %53 in 0 : vector<16x16xf32>, vector<16x16xf32> -> vector<32x16xf32>
    %55 = arith.addf %54, %1 : vector<32x16xf32>
    %cst_13 = arith.constant dense<0xFF800000> : vector<32xf32>
    %56 = vector.multi_reduction <maximumf>, %55, %cst_13 [1] : vector<32x16xf32> to vector<32xf32>
    %57 = vector.shape_cast %56 : vector<32xf32> to vector<32x1xf32>
    %58 = vector.broadcast %57 : vector<32x1xf32> to vector<32x16xf32>
    %59 = arith.subf %55, %58 : vector<32x16xf32>
    %60 = math.exp %59 : vector<32x16xf32>
    %cst_14 = arith.constant dense<0.000000e+00> : vector<32xf32>
    %61 = vector.multi_reduction <add>, %60, %cst_14 [1] : vector<32x16xf32> to vector<32xf32>
    %62 = vector.shape_cast %61 : vector<32xf32> to vector<32x1xf32>
    %63 = tpu.reciprocal %62 {approx = true} : vector<32x1xf32> -> vector<32x1xf32>
    %64 = arith.mulf %62, %63 : vector<32x1xf32>
    %cst_15 = arith.constant 2.000000e+00 : f32
    %65 = vector.broadcast %cst_15 : f32 to vector<32x1xf32>
    %66 = arith.subf %65, %64 : vector<32x1xf32>
    %67 = arith.mulf %63, %66 : vector<32x1xf32>
    %cst_16 = arith.constant 5.000000e-01 : f32
    %68 = vector.broadcast %cst_16 : f32 to vector<32x1xf32>
    %69 = arith.mulf %67, %68 : vector<32x1xf32>
    %70 = vector.broadcast %69 : vector<32x1xf32> to vector<32x16xf32>
    %71 = arith.mulf %60, %70 : vector<32x16xf32>
    %cst_17 = arith.constant dense<0.000000e+00> : vector<32x128xf32>
    %72 = tpu.matmul %71, %35, %cst_17 {dimension_numbers = #tpu.dot_dimension_numbers<[1], [0], [0], [1], [0, 0, 1, 1], [], []>} : vector<32x16xf32>, vector<16x128xf32>, vector<32x128xf32> -> vector<32x128xf32>
    %73 = vector.extract_strided_slice %72 {offsets = [0, 0], sizes = [16, 32], strides = [1, 1]} : vector<32x128xf32> to vector<16x32xf32>
    %74 = vector.extract_strided_slice %72 {offsets = [16, 32], sizes = [16, 32], strides = [1, 1]} : vector<32x128xf32> to vector<16x32xf32>
    %75 = arith.addf %73, %74 : vector<16x32xf32>
    %76 = vector.broadcast %7 : vector<1x32xf32> to vector<16x32xf32>
    %77 = arith.addf %75, %76 : vector<16x32xf32>
    %cst_18 = arith.constant 5.000000e-01 : f32
    %78 = vector.broadcast %cst_18 : f32 to vector<16x32xf32>
    %79 = arith.mulf %78, %77 : vector<16x32xf32>
    %cst_19 = arith.constant 0.707106769 : f32
    %80 = vector.broadcast %cst_19 : f32 to vector<16x32xf32>
    %81 = arith.mulf %77, %80 : vector<16x32xf32>
    %82 = math.erf %81 : vector<16x32xf32>
    %cst_20 = arith.constant 1.000000e+00 : f32
    %83 = vector.broadcast %cst_20 : f32 to vector<16x32xf32>
    %84 = arith.addf %83, %82 : vector<16x32xf32>
    %85 = arith.mulf %79, %84 : vector<16x32xf32>
    %86 = arith.addf %85, %0 : vector<16x32xf32>
    %c32 = arith.constant 32 : index
    %c0_21 = arith.constant 0 : index
    %87 = vector.load %arg0[%c32, %c0_21] : memref<120x256xf32, #tpu.memory_space<vmem>>, vector<32x256xf32>
    %c72 = arith.constant 72 : index
    %c0_22 = arith.constant 0 : index
    %88 = vector.load %arg0[%c72, %c0_22] : memref<120x256xf32, #tpu.memory_space<vmem>>, vector<8x256xf32>
    %89 = vector.extract_strided_slice %88 {offsets = [0, 0], sizes = [1, 32], strides = [1, 1]} : vector<8x256xf32> to vector<1x32xf32>
    %90 = vector.extract_strided_slice %88 {offsets = [1, 0], sizes = [1, 32], strides = [1, 1]} : vector<8x256xf32> to vector<1x32xf32>
    %91 = vector.extract_strided_slice %88 {offsets = [2, 0], sizes = [1, 256], strides = [1, 1]} : vector<8x256xf32> to vector<1x256xf32>
    %92 = vector.extract_strided_slice %88 {offsets = [3, 0], sizes = [1, 32], strides = [1, 1]} : vector<8x256xf32> to vector<1x32xf32>
    %93 = vector.extract_strided_slice %88 {offsets = [4, 0], sizes = [1, 128], strides = [1, 1]} : vector<8x256xf32> to vector<1x128xf32>
    %94 = vector.shape_cast %93 : vector<1x128xf32> to vector<1x1x128xf32>
    %95 = vector.extract_strided_slice %88 {offsets = [5, 0], sizes = [1, 128], strides = [1, 1]} : vector<8x256xf32> to vector<1x128xf32>
    %96 = vector.shape_cast %95 : vector<1x128xf32> to vector<1x1x128xf32>
    %cst_23 = arith.constant dense<0.000000e+00> : vector<16xf32>
    %97 = vector.multi_reduction <add>, %86, %cst_23 [1] : vector<16x32xf32> to vector<16xf32>
    %98 = vector.shape_cast %97 : vector<16xf32> to vector<16x1xf32>
    %cst_24 = arith.constant 3.200000e+01 : f32
    %99 = vector.broadcast %cst_24 : f32 to vector<16x1xf32>
    %100 = arith.divf %98, %99 : vector<16x1xf32>
    %101 = vector.broadcast %100 : vector<16x1xf32> to vector<16x32xf32>
    %102 = arith.subf %86, %101 : vector<16x32xf32>
    %103 = arith.mulf %102, %102 : vector<16x32xf32>
    %cst_25 = arith.constant dense<0.000000e+00> : vector<16xf32>
    %104 = vector.multi_reduction <add>, %103, %cst_25 [1] : vector<16x32xf32> to vector<16xf32>
    %105 = vector.shape_cast %104 : vector<16xf32> to vector<16x1xf32>
    %cst_26 = arith.constant 3.200000e+01 : f32
    %106 = vector.broadcast %cst_26 : f32 to vector<16x1xf32>
    %107 = arith.divf %105, %106 : vector<16x1xf32>
    %cst_27 = arith.constant 9.99999974E-6 : f32
    %108 = vector.broadcast %cst_27 : f32 to vector<16x1xf32>
    %109 = arith.addf %107, %108 : vector<16x1xf32>
    %110 = math.rsqrt %109 : vector<16x1xf32>
    %111 = vector.broadcast %110 : vector<16x1xf32> to vector<16x32xf32>
    %112 = arith.mulf %102, %111 : vector<16x32xf32>
    %113 = vector.broadcast %89 : vector<1x32xf32> to vector<16x32xf32>
    %114 = arith.mulf %112, %113 : vector<16x32xf32>
    %115 = vector.broadcast %90 : vector<1x32xf32> to vector<16x32xf32>
    %116 = arith.addf %114, %115 : vector<16x32xf32>
    %cst_28 = arith.constant dense<0.000000e+00> : vector<16x256xf32>
    %117 = tpu.matmul %116, %87, %cst_28 {dimension_numbers = #tpu.dot_dimension_numbers<[1], [0], [0], [1], [0, 0, 1, 1], [], []>} : vector<16x32xf32>, vector<32x256xf32>, vector<16x256xf32> -> vector<16x256xf32>
    %118 = vector.broadcast %91 : vector<1x256xf32> to vector<16x256xf32>
    %119 = arith.addf %117, %118 : vector<16x256xf32>
    %120 = vector.extract_strided_slice %119 {offsets = [0, 0], sizes = [16, 128], strides = [1, 1]} : vector<16x256xf32> to vector<16x128xf32>
    %121 = vector.extract_strided_slice %119 {offsets = [0, 128], sizes = [16, 128], strides = [1, 1]} : vector<16x256xf32> to vector<16x128xf32>
    %122 = vector.shape_cast %121 : vector<16x128xf32> to vector<16x1x128xf32>
    %123 = vector.shape_cast %120 : vector<16x128xf32> to vector<1x16x128xf32>
    %124 = vector.broadcast %122 : vector<16x1x128xf32> to vector<16x16x128xf32>
    %125 = vector.broadcast %123 : vector<1x16x128xf32> to vector<16x16x128xf32>
    %126 = arith.addf %124, %125 : vector<16x16x128xf32>
    %cst_29 = arith.constant 0.000000e+00 : f32
    %127 = vector.broadcast %cst_29 : f32 to vector<16x16x128xf32>
    %128 = arith.cmpf ogt, %126, %127 : vector<16x16x128xf32>
    %129 = vector.shape_cast %94 : vector<1x1x128xf32> to vector<1x1x128xf32>
    %130 = vector.broadcast %129 : vector<1x1x128xf32> to vector<16x16x128xf32>
    %131 = vector.shape_cast %96 : vector<1x1x128xf32> to vector<1x1x128xf32>
    %132 = vector.broadcast %131 : vector<1x1x128xf32> to vector<16x16x128xf32>
    %133 = arith.select %128, %130, %132 : vector<16x16x128xi1>, vector<16x16x128xf32>
    %134 = arith.mulf %126, %133 : vector<16x16x128xf32>
    %135 = vector.extract_strided_slice %134 {offsets = [0, 0, 0], sizes = [16, 16, 32], strides = [1, 1, 1]} : vector<16x16x128xf32> to vector<16x16x32xf32>
    %cst_30 = arith.constant dense<0.000000e+00> : vector<16x16xf32>
    %136 = vector.multi_reduction <add>, %135, %cst_30 [2] : vector<16x16x32xf32> to vector<16x16xf32>
    %137 = vector.extract_strided_slice %134 {offsets = [0, 0, 32], sizes = [16, 16, 32], strides = [1, 1, 1]} : vector<16x16x128xf32> to vector<16x16x32xf32>
    %cst_31 = arith.constant dense<0.000000e+00> : vector<16x16xf32>
    %138 = vector.multi_reduction <add>, %137, %cst_31 [2] : vector<16x16x32xf32> to vector<16x16xf32>
    %139 = tpu.concatenate %136, %138 in 0 : vector<16x16xf32>, vector<16x16xf32> -> vector<32x16xf32>
    %140 = arith.addf %139, %1 : vector<32x16xf32>
    %cst_32 = arith.constant dense<0xFF800000> : vector<32xf32>
    %141 = vector.multi_reduction <maximumf>, %140, %cst_32 [1] : vector<32x16xf32> to vector<32xf32>
    %142 = vector.shape_cast %141 : vector<32xf32> to vector<32x1xf32>
    %143 = vector.broadcast %142 : vector<32x1xf32> to vector<32x16xf32>
    %144 = arith.subf %140, %143 : vector<32x16xf32>
    %145 = math.exp %144 : vector<32x16xf32>
    %cst_33 = arith.constant dense<0.000000e+00> : vector<32xf32>
    %146 = vector.multi_reduction <add>, %145, %cst_33 [1] : vector<32x16xf32> to vector<32xf32>
    %147 = vector.shape_cast %146 : vector<32xf32> to vector<32x1xf32>
    %148 = tpu.reciprocal %147 {approx = true} : vector<32x1xf32> -> vector<32x1xf32>
    %149 = arith.mulf %147, %148 : vector<32x1xf32>
    %cst_34 = arith.constant 2.000000e+00 : f32
    %150 = vector.broadcast %cst_34 : f32 to vector<32x1xf32>
    %151 = arith.subf %150, %149 : vector<32x1xf32>
    %152 = arith.mulf %148, %151 : vector<32x1xf32>
    %cst_35 = arith.constant 5.000000e-01 : f32
    %153 = vector.broadcast %cst_35 : f32 to vector<32x1xf32>
    %154 = arith.mulf %152, %153 : vector<32x1xf32>
    %155 = vector.broadcast %154 : vector<32x1xf32> to vector<32x16xf32>
    %156 = arith.mulf %145, %155 : vector<32x16xf32>
    %cst_36 = arith.constant dense<0.000000e+00> : vector<32x128xf32>
    %157 = tpu.matmul %156, %120, %cst_36 {dimension_numbers = #tpu.dot_dimension_numbers<[1], [0], [0], [1], [0, 0, 1, 1], [], []>} : vector<32x16xf32>, vector<16x128xf32>, vector<32x128xf32> -> vector<32x128xf32>
    %158 = vector.extract_strided_slice %157 {offsets = [0, 0], sizes = [16, 32], strides = [1, 1]} : vector<32x128xf32> to vector<16x32xf32>
    %159 = vector.extract_strided_slice %157 {offsets = [16, 32], sizes = [16, 32], strides = [1, 1]} : vector<32x128xf32> to vector<16x32xf32>
    %160 = arith.addf %158, %159 : vector<16x32xf32>
    %161 = vector.broadcast %92 : vector<1x32xf32> to vector<16x32xf32>
    %162 = arith.addf %160, %161 : vector<16x32xf32>
    %cst_37 = arith.constant 5.000000e-01 : f32
    %163 = vector.broadcast %cst_37 : f32 to vector<16x32xf32>
    %164 = arith.mulf %163, %162 : vector<16x32xf32>
    %cst_38 = arith.constant 0.707106769 : f32
    %165 = vector.broadcast %cst_38 : f32 to vector<16x32xf32>
    %166 = arith.mulf %162, %165 : vector<16x32xf32>
    %167 = math.erf %166 : vector<16x32xf32>
    %cst_39 = arith.constant 1.000000e+00 : f32
    %168 = vector.broadcast %cst_39 : f32 to vector<16x32xf32>
    %169 = arith.addf %168, %167 : vector<16x32xf32>
    %170 = arith.mulf %164, %169 : vector<16x32xf32>
    %171 = arith.addf %170, %86 : vector<16x32xf32>
    %c80 = arith.constant 80 : index
    %c0_40 = arith.constant 0 : index
    %172 = vector.load %arg0[%c80, %c0_40] : memref<120x256xf32, #tpu.memory_space<vmem>>, vector<32x256xf32>
    %c112 = arith.constant 112 : index
    %c0_41 = arith.constant 0 : index
    %173 = vector.load %arg0[%c112, %c0_41] : memref<120x256xf32, #tpu.memory_space<vmem>>, vector<1x256xf32>
    %cst_42 = arith.constant dense<0.000000e+00> : vector<16x256xf32>
    %174 = tpu.matmul %171, %172, %cst_42 {dimension_numbers = #tpu.dot_dimension_numbers<[1], [0], [0], [1], [0, 0, 1, 1], [], []>} : vector<16x32xf32>, vector<32x256xf32>, vector<16x256xf32> -> vector<16x256xf32>
    %175 = vector.broadcast %173 : vector<1x256xf32> to vector<16x256xf32>
    %176 = arith.addf %174, %175 : vector<16x256xf32>
    %177 = vector.extract_strided_slice %176 {offsets = [0, 0], sizes = [16, 32], strides = [1, 1]} : vector<16x256xf32> to vector<16x32xf32>
    %c0_43 = arith.constant 0 : index
    %c0_44 = arith.constant 0 : index
    %178 = vector.load %arg2[%c0_43, %c0_44] : memref<16x32xf32, #tpu.memory_space<vmem>>, vector<16x32xf32>
    tpu.vector_store %arg2[%c0_43, %c0_44], %177 {strides = array<i32>} : memref<16x32xf32, #tpu.memory_space<vmem>>, vector<16x32xf32>,
    return
  }
}

</mosaic_0001>

<llo_original>
// kernel: tpu_custom_call.1
$region0: #{tpu_custom_call.1}
  #allocation0 [shape = 'u32[]', space=smem, size = 0x4, offset = 0x4, fixed_abs, tag = 'smem constant byte address 0x4 - core index']
  #allocation1 [shape = 'u32[144,128]{1,0:T(1,128)}', space=vmem, size = 0x12000, scoped, tag = 'internal scratch']
  %s0 = inlined_call_operand.hbm [shape: f32[120,256], index: 0, kind: input, shape index: {}]
  %s1 = inlined_call_operand.vmem [shape: f32[48,32], index: 1, kind: input, shape index: {}]
  %s2 = inlined_call_operand.hbm [shape: f32[16,32], index: 2, kind: output, shape index: {}]
  %s3 = sld [smem:[#allocation0]]
  $region22: #{tpu_custom_call.1} parent=0
    _
  %s5 = ssub.s32 1, %s3
  %s6 = scalar_select 0, %s5, %s3
  $region1: #{tpu_custom_call.1} parent=0
    #allocation2 [shape = 'u8[122880]{0}', space=vmem, size = 0x1e000, scoped, tag = 'input window, operand 0, single buffered']
    #allocation3 [shape = 's32[1]{0}', space=sflag, size = 0x4, scoped, tag = 'scoped memory for tpu_custom_call.1']
    #allocation4 [shape = 's32[1]{0}', space=sflag, size = 0x4, scoped, tag = 'scoped memory for tpu_custom_call.1']
    #allocation5 [shape = 'u8[8192]{0}', space=vmem, size = 0x2000, scoped, tag = 'output window, operand 0, single buffered']
    %7 = vsyncpa [#allocation3], 0
    %8 = vsyncpa [#allocation4], 0
    // Predicated region
    $region2: #{tpu_custom_call.1} parent=1 // pred_check
      _
    $region3: #{tpu_custom_call.1} parent=1 // pred_check_branch
      %10 = sbr.rel (0) target = $region5
    $region4: #{tpu_custom_call.1} parent=1 // pred_region
      %s12 = ssub.s32 3840, 3840
      %13 = vsyncadd [#allocation3], %s12
      %s14 = sshll.u32 [#allocation2], 4
      %s15 = int_to_ptr.vmem [resolvable:$true] %s14
      %20 = dma.hbm_to_vmem [thread:$0]  %s0, 3840, %s15, [#allocation3], 256, 256, 16
    $region5: #{tpu_custom_call.1} parent=1 // pred_fallthru
      _
    // Predicated region
    $region6: #{tpu_custom_call.1} parent=1 // pred_check
      _
    $region7: #{tpu_custom_call.1} parent=1 // pred_check_branch
      %22 = sbr.rel (0) target = $region9
    $region8: #{tpu_custom_call.1} parent=1 // pred_region
      _
    $region9: #{tpu_custom_call.1} parent=1 // pred_fallthru
      _
    // Predicated region
    $region10: #{tpu_custom_call.1} parent=1 // pred_check
      _
    $region11: #{tpu_custom_call.1} parent=1 // pred_check_branch
      %24 = sbr.rel (0) target = $region13
    $region12: #{tpu_custom_call.1} parent=1 // pred_region
      %25 = dma.done [#allocation3], 3840
    $region13: #{tpu_custom_call.1} parent=1 // pred_fallthru
      _
    %v26 = vld [vmem:[%s1] sm:$0xff]
    %v27 = vld [vmem:[%s1 + $0x8] sm:$0xff]
    %v28 = vld [vmem:[%s1 + $0x10] sm:$0xff]
    %v29 = vld [vmem:[%s1 + $0x18] sm:$0xff]
    %v30 = vld [vmem:[%s1 + $0x20] sm:$0xff]
    %v31 = vld [vmem:[%s1 + $0x28] sm:$0xff]
    %v32 = vld [vmem:[#allocation2] sm:$0xff]
    %v33 = vld [vmem:[#allocation2 + $0x8] sm:$0xff]
    %v34 = vld [vmem:[#allocation2 + $0x10] sm:$0xff]
    %v35 = vld [vmem:[#allocation2 + $0x18] sm:$0xff]
    %v36 = vld [vmem:[#allocation2 + $0x20] sm:$0xff]
    %v37 = vld [vmem:[#allocation2 + $0x28] sm:$0xff]
    %v38 = vld [vmem:[#allocation2 + $0x30] sm:$0xff]
    %v39 = vld [vmem:[#allocation2 + $0x38] sm:$0xff]
    %v40 = vld [vmem:[#allocation2 + $0x80] sm:$0xff]
    %v41 = vld [vmem:[#allocation2 + $0x88] sm:$0xff]
    %vm42 = vcmask 261120
    %v43 = vsel %vm42, %v26, 0.0
    %44 = vadd.xlane.f32.xlu0 %v43
    %v45 = vpop.xlane.xlu0 %44
    %v46 = vsel %vm42, %v27, 0.0
    %47 = vadd.xlane.f32.xlu0 %v46
    %v48 = vpop.xlane.xlu0 %47
    %v49 = vrcp.pop 32.0
    %v50 = vmul.f32 %v45, %v49
    %v51 = vmul.f32 %v48, %v49
    %v52 = vsub.f32 %v26, %v50
    %v53 = vsub.f32 %v27, %v51
    %v54 = vmul.f32 %v52, %v52
    %v55 = vmul.f32 %v53, %v53
    %v56 = vsel %vm42, %v54, 0.0
    %57 = vadd.xlane.f32.xlu0 %v56
    %v58 = vpop.xlane.xlu0 %57
    %v59 = vsel %vm42, %v55, 0.0
    %60 = vadd.xlane.f32.xlu0 %v59
    %v61 = vpop.xlane.xlu0 %60
    %v62 = vmul.f32 %v58, %v49
    %v63 = vmul.f32 %v61, %v49
    %v64 = vadd.f32 %v62, 1e-05
    %v65 = vadd.f32 %v63, 1e-05
    %v66 = vrsqrt.pop %v64
    %v67 = vrsqrt.pop %v65
    %v68 = vmul.f32 %v52, %v66
    %v69 = vmul.f32 %v53, %v67
    %v70 = vlaneseq
    %v71 = vshrl.u32 %v70, 7
    %v72 = vsub.s32 0, %v71
    %v73 = vrot.slane %v40, %v72
    %v74 = vmul.f32 %v68, %v73
    %v75 = vmul.f32 %v69, %v73
    %v76 = vlaneseq
    %v77 = vshrl.u32 %v76, 7
    %v78 = vsub.s32 1, %v77
    %v79 = vrot.slane %v40, %v78
    %v80 = vadd.f32 %v74, %v79
    %v81 = vadd.f32 %v75, %v79
    %v82 = vlaneseq
    %v83 = vshrl.u32 %v82, 7
    %v84 = vsub.s32 2, %v83
    %v85 = vrot.slane %v40, %v84
    %v86 = vlaneseq
    %v87 = vshrl.u32 %v86, 7
    %v88 = vsub.s32 2, %v87
    %v89 = vrot.slane %v41, %v88
    %v91 = vsel %vm42, %v80, 0
    %v94 = vsel %vm42, %v81, 0
    %96 = vmatprep.subr.mxu0 %v33
    %97 = vmatpush1.msra.mxu0 %v32
    %98 = vmatprep.subr.mxu0 %v35
    %99 = vmatpush1.msra.mxu0 %v34
    %100 = vmatprep.subr.mxu0 %v37
    %101 = vmatpush1.msra.mxu0 %v36
    %102 = vmatprep.subr.mxu0 %v39
    %103 = vmatpush1.msra.mxu0 %v38
    %104 = vmatprep.subr.mxu0 0.0
    %105 = vmatpush1.msra.mxu0 0.0
    %106 = vmatprep.subr.mxu0 0.0
    %107 = vmatpush1.msra.mxu0 0.0
    %108 = vmatprep.subr.mxu0 0.0
    %109 = vmatpush1.msra.mxu0 0.0
    %110 = vmatprep.subr.mxu0 0.0
    %111 = vmatpush1.msra.mxu0 0.0
    %112 = vmatprep.subr.mxu0 0.0
    %113 = vmatpush1.msra.mxu0 0.0
    %114 = vmatprep.subr.mxu0 0.0
    %115 = vmatpush1.msra.mxu0 0.0
    %116 = vmatprep.subr.mxu0 0.0
    %117 = vmatpush1.msra.mxu0 0.0
    %118 = vmatprep.subr.mxu0 0.0
    %119 = vmatpush1.msra.mxu0 0.0
    %120 = vmatprep.subr.mxu0 0.0
    %121 = vmatpush1.msra.mxu0 0.0
    %122 = vmatprep.subr.mxu0 0.0
    %123 = vmatpush1.msra.mxu0 0.0
    %124 = vmatprep.subr.mxu0 0.0
    %125 = vmatpush1.msra.mxu0 0.0
    %126 = vmatprep.subr.mxu0 0.0
    %127 = vmatpush1.msra.mxu0 0.0
    %128 = vmatprep.subr.mxu0 0.0
    %129 = vmatpush1.msra.mxu0 0.0
    %130 = vmatprep.subr.mxu0 0.0
    %131 = vmatpush1.msra.mxu0 0.0
    %132 = vmatprep.subr.mxu0 0.0
    %133 = vmatpush1.msra.mxu0 0.0
    %134 = vmatprep.subr.mxu0 0.0
    %135 = vmatpush1.msra.mxu0 0.0
    %136 = vmatprep.subr.mxu0 0.0
    %137 = vmatpush1.msra.mxu0 0.0
    %138 = vmatprep.subr.mxu0 0.0
    %139 = vmatpush1.msra.mxu0 0.0
    %140 = vmatprep.subr.mxu0 0.0
    %141 = vmatpush1.msra.mxu0 0.0
    %142 = vmatprep.subr.mxu0 0.0
    %143 = vmatpush1.msra.mxu0 0.0
    %144 = vmatprep.subr.mxu0 0.0
    %145 = vmatpush1.msra.mxu0 0.0
    %146 = vmatprep.subr.mxu0 0.0
    %147 = vmatpush1.msra.mxu0 0.0
    %148 = vmatprep.subr.mxu0 0.0
    %149 = vmatpush1.msra.mxu0 0.0
    %150 = vmatprep.subr.mxu0 0.0
    %151 = vmatpush1.msra.mxu0 0.0
    %152 = vmatprep.subr.mxu0 0.0
    %153 = vmatpush1.msra.mxu0 0.0
    %154 = vmatprep.subr.mxu0 0.0
    %155 = vmatpush1.msra.mxu0 0.0
    %156 = vmatprep.subr.mxu0 0.0
    %157 = vmatpush1.msra.mxu0 0.0
    %158 = vmatprep.subr.mxu0 0.0
    %159 = vmatpush1.msra.mxu0 0.0
    %160 = vmatprep.mubr.f32.mxu0 0.0
    %161 = vmatmul.mubr.f32.gmra.mrb[0].mxu0 %v91
    %v162 = vpop.f32.mrb[0].mxu0
    %v163 = vadd.f32 %v85, %v162
    %v164 = vpop.f32.mrb[0].mxu0
    %v165 = vadd.f32 %v89, %v164
    %166 = vmatprep.mubr.f32.mxu0 0.0
    %167 = vmatmul.mubr.f32.gmra.mrb[0].mxu0 %v94
    %v168 = vpop.f32.mrb[0].mxu0
    %v169 = vadd.f32 %v85, %v168
    %v170 = vpop.f32.mrb[0].mxu0
    %v171 = vadd.f32 %v89, %v170
    %172 = vdwg.mxu0
    %v175 = vcombine.high %v165, %v165
    %v177 = vunpack.c.l.s4 1966171168
    %v178 = vunpack.c.0.s8 %v177
    %v179 = vlaneseq
    %v180 = vshrl.u32 %v179, 7
    %v181 = vsub.s32 %v178, %v180
    %v182 = vrot.slane %v165, %v181
    %v184 = vunpack.c.l.s4 1966171168
    %v185 = vunpack.c.0.s8 %v184
    %v186 = vlaneseq
    %v187 = vshrl.u32 %v186, 7
    %v188 = vsub.s32 %v185, %v187
    %v189 = vrot.slane %v175, %v188
    %v190 = vcombine.high %v182, %v182
    %v191 = vcombine.high %v189, %v189
    %v193 = vunpack.c.l.s4 1966171168
    %v194 = vunpack.c.0.s8 %v193
    %v195 = vlaneseq
    %v196 = vshrl.u32 %v195, 7
    %v197 = vsub.s32 %v194, %v196
    %v198 = vrot.slane %v182, %v197
    %v200 = vunpack.c.l.s4 1966171168
    %v201 = vunpack.c.0.s8 %v200
    %v202 = vlaneseq
    %v203 = vshrl.u32 %v202, 7
    %v204 = vsub.s32 %v201, %v203
    %v205 = vrot.slane %v189, %v204
    %v207 = vunpack.c.l.s4 1966171168
    %v208 = vunpack.c.0.s8 %v207
    %v209 = vlaneseq
    %v210 = vshrl.u32 %v209, 7
    %v211 = vsub.s32 %v208, %v210
    %v212 = vrot.slane %v190, %v211
    %v214 = vunpack.c.l.s4 1966171168
    %v215 = vunpack.c.0.s8 %v214
    %v216 = vlaneseq
    %v217 = vshrl.u32 %v216, 7
    %v218 = vsub.s32 %v215, %v217
    %v219 = vrot.slane %v191, %v218
    %v220 = vcombine.high %v198, %v198
    %v221 = vcombine.high %v205, %v205
    %v222 = vcombine.high %v212, %v212
    %v223 = vcombine.high %v219, %v219
    %v224 = vcombine.high %v171, %v171
    %v226 = vunpack.c.l.s4 1966171168
    %v227 = vunpack.c.0.s8 %v226
    %v228 = vlaneseq
    %v229 = vshrl.u32 %v228, 7
    %v230 = vsub.s32 %v227, %v229
    %v231 = vrot.slane %v171, %v230
    %v233 = vunpack.c.l.s4 1966171168
    %v234 = vunpack.c.0.s8 %v233
    %v235 = vlaneseq
    %v236 = vshrl.u32 %v235, 7
    %v237 = vsub.s32 %v234, %v236
    %v238 = vrot.slane %v224, %v237
    %v239 = vcombine.high %v231, %v231
    %v240 = vcombine.high %v238, %v238
    %v242 = vunpack.c.l.s4 1966171168
    %v243 = vunpack.c.0.s8 %v242
    %v244 = vlaneseq
    %v245 = vshrl.u32 %v244, 7
    %v246 = vsub.s32 %v243, %v245
    %v247 = vrot.slane %v231, %v246
    %v249 = vunpack.c.l.s4 1966171168
    %v250 = vunpack.c.0.s8 %v249
    %v251 = vlaneseq
    %v252 = vshrl.u32 %v251, 7
    %v253 = vsub.s32 %v250, %v252
    %v254 = vrot.slane %v238, %v253
    %v256 = vunpack.c.l.s4 1966171168
    %v257 = vunpack.c.0.s8 %v256
    %v258 = vlaneseq
    %v259 = vshrl.u32 %v258, 7
    %v260 = vsub.s32 %v257, %v259
    %v261 = vrot.slane %v239, %v260
    %v263 = vunpack.c.l.s4 1966171168
    %v264 = vunpack.c.0.s8 %v263
    %v265 = vlaneseq
    %v266 = vshrl.u32 %v265, 7
    %v267 = vsub.s32 %v264, %v266
    %v268 = vrot.slane %v240, %v267
    %v269 = vcombine.high %v247, %v247
    %v270 = vcombine.high %v254, %v254
    %v271 = vcombine.high %v261, %v261
    %v272 = vcombine.high %v268, %v268
    %v273 = vlaneseq
    %v274 = vshrl.u32 %v273, 7
    %v275 = vsub.s32 0, %v274
    %v276 = vrot.slane %v198, %v275
    %v277 = vlaneseq
    %v278 = vshrl.u32 %v277, 7
    %v279 = vsub.s32 0, %v278
    %v280 = vrot.slane %v212, %v279
    %v281 = vlaneseq
    %v282 = vshrl.u32 %v281, 7
    %v283 = vsub.s32 0, %v282
    %v284 = vrot.slane %v220, %v283
    %v285 = vlaneseq
    %v286 = vshrl.u32 %v285, 7
    %v287 = vsub.s32 0, %v286
    %v288 = vrot.slane %v222, %v287
    %v289 = vlaneseq
    %v290 = vshrl.u32 %v289, 7
    %v291 = vsub.s32 0, %v290
    %v292 = vrot.slane %v205, %v291
    %v293 = vlaneseq
    %v294 = vshrl.u32 %v293, 7
    %v295 = vsub.s32 0, %v294
    %v296 = vrot.slane %v219, %v295
    %v297 = vlaneseq
    %v298 = vshrl.u32 %v297, 7
    %v299 = vsub.s32 0, %v298
    %v300 = vrot.slane %v221, %v299
    %v301 = vlaneseq
    %v302 = vshrl.u32 %v301, 7
    %v303 = vsub.s32 0, %v302
    %v304 = vrot.slane %v223, %v303
    %v305 = vlaneseq
    %v306 = vshrl.u32 %v305, 7
    %v307 = vsub.s32 0, %v306
    %v308 = vrot.slane %v247, %v307
    %v309 = vlaneseq
    %v310 = vshrl.u32 %v309, 7
    %v311 = vsub.s32 0, %v310
    %v312 = vrot.slane %v261, %v311
    %v313 = vlaneseq
    %v314 = vshrl.u32 %v313, 7
    %v315 = vsub.s32 0, %v314
    %v316 = vrot.slane %v269, %v315
    %v317 = vlaneseq
    %v318 = vshrl.u32 %v317, 7
    %v319 = vsub.s32 0, %v318
    %v320 = vrot.slane %v271, %v319
    %v321 = vlaneseq
    %v322 = vshrl.u32 %v321, 7
    %v323 = vsub.s32 0, %v322
    %v324 = vrot.slane %v254, %v323
    %v325 = vlaneseq
    %v326 = vshrl.u32 %v325, 7
    %v327 = vsub.s32 0, %v326
    %v328 = vrot.slane %v268, %v327
    %v329 = vlaneseq
    %v330 = vshrl.u32 %v329, 7
    %v331 = vsub.s32 0, %v330
    %v332 = vrot.slane %v270, %v331
    %v333 = vlaneseq
    %v334 = vshrl.u32 %v333, 7
    %v335 = vsub.s32 0, %v334
    %v336 = vrot.slane %v272, %v335
    %v353 = vadd.f32 %v276, %v163
    %v354 = vadd.f32 %v276, %v169
    %v355 = vadd.f32 %v280, %v163
    %v356 = vadd.f32 %v280, %v169
    %v357 = vadd.f32 %v284, %v163
    %v358 = vadd.f32 %v284, %v169
    %v359 = vadd.f32 %v288, %v163
    %v360 = vadd.f32 %v288, %v169
    %v361 = vadd.f32 %v292, %v163
    %v362 = vadd.f32 %v292, %v169
    %v363 = vadd.f32 %v296, %v163
    %v364 = vadd.f32 %v296, %v169
    %v365 = vadd.f32 %v300, %v163
    %v366 = vadd.f32 %v300, %v169
    %v367 = vadd.f32 %v304, %v163
    %v368 = vadd.f32 %v304, %v169
    %v369 = vadd.f32 %v308, %v163
    %v370 = vadd.f32 %v308, %v169
    %v371 = vadd.f32 %v312, %v163
    %v372 = vadd.f32 %v312, %v169
    %v373 = vadd.f32 %v316, %v163
    %v374 = vadd.f32 %v316, %v169
    %v375 = vadd.f32 %v320, %v163
    %v376 = vadd.f32 %v320, %v169
    %v377 = vadd.f32 %v324, %v163
    %v378 = vadd.f32 %v324, %v169
    %v379 = vadd.f32 %v328, %v163
    %v380 = vadd.f32 %v328, %v169
    %v381 = vadd.f32 %v332, %v163
    %v382 = vadd.f32 %v332, %v169
    %v383 = vadd.f32 %v336, %v163
    %v384 = vadd.f32 %v336, %v169
    %vm385 = vcmp.gt.f32.partialorder %v353, 0.0
    %vm386 = vcmp.gt.f32.partialorder %v354, 0.0
    %vm387 = vcmp.gt.f32.partialorder %v355, 0.0
    %vm388 = vcmp.gt.f32.partialorder %v356, 0.0
    %vm389 = vcmp.gt.f32.partialorder %v357, 0.0
    %vm390 = vcmp.gt.f32.partialorder %v358, 0.0
    %vm391 = vcmp.gt.f32.partialorder %v359, 0.0
    %vm392 = vcmp.gt.f32.partialorder %v360, 0.0
    %vm393 = vcmp.gt.f32.partialorder %v361, 0.0
    %vm394 = vcmp.gt.f32.partialorder %v362, 0.0
    %vm395 = vcmp.gt.f32.partialorder %v363, 0.0
    %vm396 = vcmp.gt.f32.partialorder %v364, 0.0
    %vm397 = vcmp.gt.f32.partialorder %v365, 0.0
    %vm398 = vcmp.gt.f32.partialorder %v366, 0.0
    %vm399 = vcmp.gt.f32.partialorder %v367, 0.0
    %vm400 = vcmp.gt.f32.partialorder %v368, 0.0
    %vm401 = vcmp.gt.f32.partialorder %v369, 0.0
    %vm402 = vcmp.gt.f32.partialorder %v370, 0.0
    %vm403 = vcmp.gt.f32.partialorder %v371, 0.0
    %vm404 = vcmp.gt.f32.partialorder %v372, 0.0
    %vm405 = vcmp.gt.f32.partialorder %v373, 0.0
    %vm406 = vcmp.gt.f32.partialorder %v374, 0.0
    %vm407 = vcmp.gt.f32.partialorder %v375, 0.0
    %vm408 = vcmp.gt.f32.partialorder %v376, 0.0
    %vm409 = vcmp.gt.f32.partialorder %v377, 0.0
    %vm410 = vcmp.gt.f32.partialorder %v378, 0.0
    %vm411 = vcmp.gt.f32.partialorder %v379, 0.0
    %vm412 = vcmp.gt.f32.partialorder %v380, 0.0
    %vm413 = vcmp.gt.f32.partialorder %v381, 0.0
    %vm414 = vcmp.gt.f32.partialorder %v382, 0.0
    %vm415 = vcmp.gt.f32.partialorder %v383, 0.0
    %vm416 = vcmp.gt.f32.partialorder %v384, 0.0
    %v417 = vlaneseq
    %v418 = vshrl.u32 %v417, 7
    %v419 = vsub.s32 4, %v418
    %v420 = vrot.slane %v40, %v419
    %v421 = vlaneseq
    %v422 = vshrl.u32 %v421, 7
    %v423 = vsub.s32 5, %v422
    %v424 = vrot.slane %v40, %v423
    %v425 = vsel %vm385, %v420, %v424
    %v426 = vsel %vm386, %v420, %v424
    %v427 = vsel %vm387, %v420, %v424
    %v428 = vsel %vm388, %v420, %v424
    %v429 = vsel %vm389, %v420, %v424
    %v430 = vsel %vm390, %v420, %v424
    %v431 = vsel %vm391, %v420, %v424
    %v432 = vsel %vm392, %v420, %v424
    %v433 = vsel %vm393, %v420, %v424
    %v434 = vsel %vm394, %v420, %v424
    %v435 = vsel %vm395, %v420, %v424
    %v436 = vsel %vm396, %v420, %v424
    %v437 = vsel %vm397, %v420, %v424
    %v438 = vsel %vm398, %v420, %v424
    %v439 = vsel %vm399, %v420, %v424
    %v440 = vsel %vm400, %v420, %v424
    %v441 = vsel %vm401, %v420, %v424
    %v442 = vsel %vm402, %v420, %v424
    %v443 = vsel %vm403, %v420, %v424
    %v444 = vsel %vm404, %v420, %v424
    %v445 = vsel %vm405, %v420, %v424
    %v446 = vsel %vm406, %v420, %v424
    %v447 = vsel %vm407, %v420, %v424
    %v448 = vsel %vm408, %v420, %v424
    %v449 = vsel %vm409, %v420, %v424
    %v450 = vsel %vm410, %v420, %v424
    %v451 = vsel %vm411, %v420, %v424
    %v452 = vsel %vm412, %v420, %v424
    %v453 = vsel %vm413, %v420, %v424
    %v454 = vsel %vm414, %v420, %v424
    %v455 = vsel %vm415, %v420, %v424
    %v456 = vsel %vm416, %v420, %v424
    %v457 = vmul.f32 %v353, %v425
    %v458 = vmul.f32 %v354, %v426
    %v459 = vmul.f32 %v355, %v427
    %v460 = vmul.f32 %v356, %v428
    %v461 = vmul.f32 %v357, %v429
    %v462 = vmul.f32 %v358, %v430
    %v463 = vmul.f32 %v359, %v431
    %v464 = vmul.f32 %v360, %v432
    %v465 = vmul.f32 %v361, %v433
    %v466 = vmul.f32 %v362, %v434
    %v467 = vmul.f32 %v363, %v435
    %v468 = vmul.f32 %v364, %v436
    %v469 = vmul.f32 %v365, %v437
    %v470 = vmul.f32 %v366, %v438
    %v471 = vmul.f32 %v367, %v439
    %v472 = vmul.f32 %v368, %v440
    %v473 = vmul.f32 %v369, %v441
    %v474 = vmul.f32 %v370, %v442
    %v475 = vmul.f32 %v371, %v443
    %v476 = vmul.f32 %v372, %v444
    %v477 = vmul.f32 %v373, %v445
    %v478 = vmul.f32 %v374, %v446
    %v479 = vmul.f32 %v375, %v447
    %v480 = vmul.f32 %v376, %v448
    %v481 = vmul.f32 %v377, %v449
    %v482 = vmul.f32 %v378, %v450
    %v483 = vmul.f32 %v379, %v451
    %v484 = vmul.f32 %v380, %v452
    %v485 = vmul.f32 %v381, %v453
    %v486 = vmul.f32 %v382, %v454
    %v487 = vmul.f32 %v383, %v455
    %v488 = vmul.f32 %v384, %v456
    %v489 = vsel %vm42, %v457, 0.0
    %490 = vadd.xlane.f32.xlu0 %v489
    %v491 = vpop.xlane.xlu0 %490
    %v492 = vsel %vm42, %v458, 0.0
    %493 = vadd.xlane.f32.xlu0 %v492
    %v494 = vpop.xlane.xlu0 %493
    %v495 = vsel %vm42, %v459, 0.0
    %496 = vadd.xlane.f32.xlu0 %v495
    %v497 = vpop.xlane.xlu0 %496
    %v498 = vsel %vm42, %v460, 0.0
    %499 = vadd.xlane.f32.xlu0 %v498
    %v500 = vpop.xlane.xlu0 %499
    %v501 = vsel %vm42, %v461, 0.0
    %502 = vadd.xlane.f32.xlu0 %v501
    %v503 = vpop.xlane.xlu0 %502
    %v504 = vsel %vm42, %v462, 0.0
    %505 = vadd.xlane.f32.xlu0 %v504
    %v506 = vpop.xlane.xlu0 %505
    %v507 = vsel %vm42, %v463, 0.0
    %508 = vadd.xlane.f32.xlu0 %v507
    %v509 = vpop.xlane.xlu0 %508
    %v510 = vsel %vm42, %v464, 0.0
    %511 = vadd.xlane.f32.xlu0 %v510
    %v512 = vpop.xlane.xlu0 %511
    %v513 = vsel %vm42, %v465, 0.0
    %514 = vadd.xlane.f32.xlu0 %v513
    %v515 = vpop.xlane.xlu0 %514
    %v516 = vsel %vm42, %v466, 0.0
    %517 = vadd.xlane.f32.xlu0 %v516
    %v518 = vpop.xlane.xlu0 %517
    %v519 = vsel %vm42, %v467, 0.0
    %520 = vadd.xlane.f32.xlu0 %v519
    %v521 = vpop.xlane.xlu0 %520
    %v522 = vsel %vm42, %v468, 0.0
    %523 = vadd.xlane.f32.xlu0 %v522
    %v524 = vpop.xlane.xlu0 %523
    %v525 = vsel %vm42, %v469, 0.0
    %526 = vadd.xlane.f32.xlu0 %v525
    %v527 = vpop.xlane.xlu0 %526
    %v528 = vsel %vm42, %v470, 0.0
    %529 = vadd.xlane.f32.xlu0 %v528
    %v530 = vpop.xlane.xlu0 %529
    %v531 = vsel %vm42, %v471, 0.0
    %532 = vadd.xlane.f32.xlu0 %v531
    %v533 = vpop.xlane.xlu0 %532
    %v534 = vsel %vm42, %v472, 0.0
    %535 = vadd.xlane.f32.xlu0 %v534
    %v536 = vpop.xlane.xlu0 %535
    %v537 = vsel %vm42, %v473, 0.0
    %538 = vadd.xlane.f32.xlu0 %v537
    %v539 = vpop.xlane.xlu0 %538
    %v540 = vsel %vm42, %v474, 0.0
    %541 = vadd.xlane.f32.xlu0 %v540
    %v542 = vpop.xlane.xlu0 %541
    %v543 = vsel %vm42, %v475, 0.0
    %544 = vadd.xlane.f32.xlu0 %v543
    %v545 = vpop.xlane.xlu0 %544
    %v546 = vsel %vm42, %v476, 0.0
    %547 = vadd.xlane.f32.xlu0 %v546
    %v548 = vpop.xlane.xlu0 %547
    %v549 = vsel %vm42, %v477, 0.0
    %550 = vadd.xlane.f32.xlu0 %v549
    %v551 = vpop.xlane.xlu0 %550
    %v552 = vsel %vm42, %v478, 0.0
    %553 = vadd.xlane.f32.xlu0 %v552
    %v554 = vpop.xlane.xlu0 %553
    %v555 = vsel %vm42, %v479, 0.0
    %556 = vadd.xlane.f32.xlu0 %v555
    %v557 = vpop.xlane.xlu0 %556
    %v558 = vsel %vm42, %v480, 0.0
    %559 = vadd.xlane.f32.xlu0 %v558
    %v560 = vpop.xlane.xlu0 %559
    %v561 = vsel %vm42, %v481, 0.0
    %562 = vadd.xlane.f32.xlu0 %v561
    %v563 = vpop.xlane.xlu0 %562
    %v564 = vsel %vm42, %v482, 0.0
    %565 = vadd.xlane.f32.xlu0 %v564
    %v566 = vpop.xlane.xlu0 %565
    %v567 = vsel %vm42, %v483, 0.0
    %568 = vadd.xlane.f32.xlu0 %v567
    %v569 = vpop.xlane.xlu0 %568
    %v570 = vsel %vm42, %v484, 0.0
    %571 = vadd.xlane.f32.xlu0 %v570
    %v572 = vpop.xlane.xlu0 %571
    %v573 = vsel %vm42, %v485, 0.0
    %574 = vadd.xlane.f32.xlu0 %v573
    %v575 = vpop.xlane.xlu0 %574
    %v576 = vsel %vm42, %v486, 0.0
    %577 = vadd.xlane.f32.xlu0 %v576
    %v578 = vpop.xlane.xlu0 %577
    %v579 = vsel %vm42, %v487, 0.0
    %580 = vadd.xlane.f32.xlu0 %v579
    %v581 = vpop.xlane.xlu0 %580
    %v582 = vsel %vm42, %v488, 0.0
    %583 = vadd.xlane.f32.xlu0 %v582
    %v584 = vpop.xlane.xlu0 %583
    %617 = vrot.lane.b32.xlu0 %v457, 96
    %v618 = vpop.permute.xlu0 %617
    %619 = vrot.lane.b32.xlu0 %v458, 96
    %v620 = vpop.permute.xlu0 %619
    %621 = vrot.lane.b32.xlu0 %v459, 96
    %v622 = vpop.permute.xlu0 %621
    %623 = vrot.lane.b32.xlu0 %v460, 96
    %v624 = vpop.permute.xlu0 %623
    %625 = vrot.lane.b32.xlu0 %v461, 96
    %v626 = vpop.permute.xlu0 %625
    %627 = vrot.lane.b32.xlu0 %v462, 96
    %v628 = vpop.permute.xlu0 %627
    %629 = vrot.lane.b32.xlu0 %v463, 96
    %v630 = vpop.permute.xlu0 %629
    %631 = vrot.lane.b32.xlu0 %v464, 96
    %v632 = vpop.permute.xlu0 %631
    %633 = vrot.lane.b32.xlu0 %v465, 96
    %v634 = vpop.permute.xlu0 %633
    %635 = vrot.lane.b32.xlu0 %v466, 96
    %v636 = vpop.permute.xlu0 %635
    %637 = vrot.lane.b32.xlu0 %v467, 96
    %v638 = vpop.permute.xlu0 %637
    %639 = vrot.lane.b32.xlu0 %v468, 96
    %v640 = vpop.permute.xlu0 %639
    %641 = vrot.lane.b32.xlu0 %v469, 96
    %v642 = vpop.permute.xlu0 %641
    %643 = vrot.lane.b32.xlu0 %v470, 96
    %v644 = vpop.permute.xlu0 %643
    %645 = vrot.lane.b32.xlu0 %v471, 96
    %v646 = vpop.permute.xlu0 %645
    %647 = vrot.lane.b32.xlu0 %v472, 96
    %v648 = vpop.permute.xlu0 %647
    %649 = vrot.lane.b32.xlu0 %v473, 96
    %v650 = vpop.permute.xlu0 %649
    %651 = vrot.lane.b32.xlu0 %v474, 96
    %v652 = vpop.permute.xlu0 %651
    %653 = vrot.lane.b32.xlu0 %v475, 96
    %v654 = vpop.permute.xlu0 %653
    %655 = vrot.lane.b32.xlu0 %v476, 96
    %v656 = vpop.permute.xlu0 %655
    %657 = vrot.lane.b32.xlu0 %v477, 96
    %v658 = vpop.permute.xlu0 %657
    %659 = vrot.lane.b32.xlu0 %v478, 96
    %v660 = vpop.permute.xlu0 %659
    %661 = vrot.lane.b32.xlu0 %v479, 96
    %v662 = vpop.permute.xlu0 %661
    %663 = vrot.lane.b32.xlu0 %v480, 96
    %v664 = vpop.permute.xlu0 %663
    %665 = vrot.lane.b32.xlu0 %v481, 96
    %v666 = vpop.permute.xlu0 %665
    %667 = vrot.lane.b32.xlu0 %v482, 96
    %v668 = vpop.permute.xlu0 %667
    %669 = vrot.lane.b32.xlu0 %v483, 96
    %v670 = vpop.permute.xlu0 %669
    %671 = vrot.lane.b32.xlu0 %v484, 96
    %v672 = vpop.permute.xlu0 %671
    %673 = vrot.lane.b32.xlu0 %v485, 96
    %v674 = vpop.permute.xlu0 %673
    %675 = vrot.lane.b32.xlu0 %v486, 96
    %v676 = vpop.permute.xlu0 %675
    %677 = vrot.lane.b32.xlu0 %v487, 96
    %v678 = vpop.permute.xlu0 %677
    %679 = vrot.lane.b32.xlu0 %v488, 96
    %v680 = vpop.permute.xlu0 %679
    %v713 = vsel %vm42, %v618, 0.0
    %714 = vadd.xlane.f32.xlu0 %v713
    %v715 = vpop.xlane.xlu0 %714
    %v716 = vsel %vm42, %v620, 0.0
    %717 = vadd.xlane.f32.xlu0 %v716
    %v718 = vpop.xlane.xlu0 %717
    %v719 = vsel %vm42, %v622, 0.0
    %720 = vadd.xlane.f32.xlu0 %v719
    %v721 = vpop.xlane.xlu0 %720
    %v722 = vsel %vm42, %v624, 0.0
    %723 = vadd.xlane.f32.xlu0 %v722
    %v724 = vpop.xlane.xlu0 %723
    %v725 = vsel %vm42, %v626, 0.0
    %726 = vadd.xlane.f32.xlu0 %v725
    %v727 = vpop.xlane.xlu0 %726
    %v728 = vsel %vm42, %v628, 0.0
    %729 = vadd.xlane.f32.xlu0 %v728
    %v730 = vpop.xlane.xlu0 %729
    %v731 = vsel %vm42, %v630, 0.0
    %732 = vadd.xlane.f32.xlu0 %v731
    %v733 = vpop.xlane.xlu0 %732
    %v734 = vsel %vm42, %v632, 0.0
    %735 = vadd.xlane.f32.xlu0 %v734
    %v736 = vpop.xlane.xlu0 %735
    %v737 = vsel %vm42, %v634, 0.0
    %738 = vadd.xlane.f32.xlu0 %v737
    %v739 = vpop.xlane.xlu0 %738
    %v740 = vsel %vm42, %v636, 0.0
    %741 = vadd.xlane.f32.xlu0 %v740
    %v742 = vpop.xlane.xlu0 %741
    %v743 = vsel %vm42, %v638, 0.0
    %744 = vadd.xlane.f32.xlu0 %v743
    %v745 = vpop.xlane.xlu0 %744
    %v746 = vsel %vm42, %v640, 0.0
    %747 = vadd.xlane.f32.xlu0 %v746
    %v748 = vpop.xlane.xlu0 %747
    %v749 = vsel %vm42, %v642, 0.0
    %750 = vadd.xlane.f32.xlu0 %v749
    %v751 = vpop.xlane.xlu0 %750
    %v752 = vsel %vm42, %v644, 0.0
    %753 = vadd.xlane.f32.xlu0 %v752
    %v754 = vpop.xlane.xlu0 %753
    %v755 = vsel %vm42, %v646, 0.0
    %756 = vadd.xlane.f32.xlu0 %v755
    %v757 = vpop.xlane.xlu0 %756
    %v758 = vsel %vm42, %v648, 0.0
    %759 = vadd.xlane.f32.xlu0 %v758
    %v760 = vpop.xlane.xlu0 %759
    %v761 = vsel %vm42, %v650, 0.0
    %762 = vadd.xlane.f32.xlu0 %v761
    %v763 = vpop.xlane.xlu0 %762
    %v764 = vsel %vm42, %v652, 0.0
    %765 = vadd.xlane.f32.xlu0 %v764
    %v766 = vpop.xlane.xlu0 %765
    %v767 = vsel %vm42, %v654, 0.0
    %768 = vadd.xlane.f32.xlu0 %v767
    %v769 = vpop.xlane.xlu0 %768
    %v770 = vsel %vm42, %v656, 0.0
    %771 = vadd.xlane.f32.xlu0 %v770
    %v772 = vpop.xlane.xlu0 %771
    %v773 = vsel %vm42, %v658, 0.0
    %774 = vadd.xlane.f32.xlu0 %v773
    %v775 = vpop.xlane.xlu0 %774
    %v776 = vsel %vm42, %v660, 0.0
    %777 = vadd.xlane.f32.xlu0 %v776
    %v778 = vpop.xlane.xlu0 %777
    %v779 = vsel %vm42, %v662, 0.0
    %780 = vadd.xlane.f32.xlu0 %v779
    %v781 = vpop.xlane.xlu0 %780
    %v782 = vsel %vm42, %v664, 0.0
    %783 = vadd.xlane.f32.xlu0 %v782
    %v784 = vpop.xlane.xlu0 %783
    %v785 = vsel %vm42, %v666, 0.0
    %786 = vadd.xlane.f32.xlu0 %v785
    %v787 = vpop.xlane.xlu0 %786
    %v788 = vsel %vm42, %v668, 0.0
    %789 = vadd.xlane.f32.xlu0 %v788
    %v790 = vpop.xlane.xlu0 %789
    %v791 = vsel %vm42, %v670, 0.0
    %792 = vadd.xlane.f32.xlu0 %v791
    %v793 = vpop.xlane.xlu0 %792
    %v794 = vsel %vm42, %v672, 0.0
    %795 = vadd.xlane.f32.xlu0 %v794
    %v796 = vpop.xlane.xlu0 %795
    %v797 = vsel %vm42, %v674, 0.0
    %798 = vadd.xlane.f32.xlu0 %v797
    %v799 = vpop.xlane.xlu0 %798
    %v800 = vsel %vm42, %v676, 0.0
    %801 = vadd.xlane.f32.xlu0 %v800
    %v802 = vpop.xlane.xlu0 %801
    %v803 = vsel %vm42, %v678, 0.0
    %804 = vadd.xlane.f32.xlu0 %v803
    %v805 = vpop.xlane.xlu0 %804
    %v806 = vsel %vm42, %v680, 0.0
    %807 = vadd.xlane.f32.xlu0 %v806
    %v808 = vpop.xlane.xlu0 %807
    %v841 = vlaneseq
    %v842 = vand.u32 %v841, 127
    %v843 = vlaneseq
    %v844 = vshrl.u32 %v843, 7
    %v845 = vsub.s32 %v842, %v844
    %v846 = vrot.slane %v491, %v845
    %v847 = vadd.s32 %v842, 4294967288
    %v848 = vlaneseq
    %v849 = vshrl.u32 %v848, 7
    %v850 = vsub.s32 %v847, %v849
    %v851 = vrot.slane %v494, %v850
    %vm852 = vcmask 130112
    %v853 = vsel %vm852, %v851, %v846
    %v854 = vlaneseq
    %v855 = vshrl.u32 %v854, 7
    %v856 = vsub.s32 %v842, %v855
    %v857 = vrot.slane %v497, %v856
    %v858 = vlaneseq
    %v859 = vshrl.u32 %v858, 7
    %v860 = vsub.s32 %v847, %v859
    %v861 = vrot.slane %v500, %v860
    %v862 = vsel %vm852, %v861, %v857
    %v863 = vlaneseq
    %v864 = vshrl.u32 %v863, 7
    %v865 = vsub.s32 %v842, %v864
    %v866 = vrot.slane %v503, %v865
    %v867 = vlaneseq
    %v868 = vshrl.u32 %v867, 7
    %v869 = vsub.s32 %v847, %v868
    %v870 = vrot.slane %v506, %v869
    %v871 = vsel %vm852, %v870, %v866
    %v872 = vlaneseq
    %v873 = vshrl.u32 %v872, 7
    %v874 = vsub.s32 %v842, %v873
    %v875 = vrot.slane %v509, %v874
    %v876 = vlaneseq
    %v877 = vshrl.u32 %v876, 7
    %v878 = vsub.s32 %v847, %v877
    %v879 = vrot.slane %v512, %v878
    %v880 = vsel %vm852, %v879, %v875
    %v881 = vlaneseq
    %v882 = vshrl.u32 %v881, 7
    %v883 = vsub.s32 %v842, %v882
    %v884 = vrot.slane %v515, %v883
    %v885 = vlaneseq
    %v886 = vshrl.u32 %v885, 7
    %v887 = vsub.s32 %v847, %v886
    %v888 = vrot.slane %v518, %v887
    %v889 = vsel %vm852, %v888, %v884
    %v890 = vlaneseq
    %v891 = vshrl.u32 %v890, 7
    %v892 = vsub.s32 %v842, %v891
    %v893 = vrot.slane %v521, %v892
    %v894 = vlaneseq
    %v895 = vshrl.u32 %v894, 7
    %v896 = vsub.s32 %v847, %v895
    %v897 = vrot.slane %v524, %v896
    %v898 = vsel %vm852, %v897, %v893
    %v899 = vlaneseq
    %v900 = vshrl.u32 %v899, 7
    %v901 = vsub.s32 %v842, %v900
    %v902 = vrot.slane %v527, %v901
    %v903 = vlaneseq
    %v904 = vshrl.u32 %v903, 7
    %v905 = vsub.s32 %v847, %v904
    %v906 = vrot.slane %v530, %v905
    %v907 = vsel %vm852, %v906, %v902
    %v908 = vlaneseq
    %v909 = vshrl.u32 %v908, 7
    %v910 = vsub.s32 %v842, %v909
    %v911 = vrot.slane %v533, %v910
    %v912 = vlaneseq
    %v913 = vshrl.u32 %v912, 7
    %v914 = vsub.s32 %v847, %v913
    %v915 = vrot.slane %v536, %v914
    %v916 = vsel %vm852, %v915, %v911
    %v917 = vlaneseq
    %v918 = vshrl.u32 %v917, 7
    %v919 = vsub.s32 %v842, %v918
    %v920 = vrot.slane %v539, %v919
    %v921 = vlaneseq
    %v922 = vshrl.u32 %v921, 7
    %v923 = vsub.s32 %v847, %v922
    %v924 = vrot.slane %v542, %v923
    %v925 = vsel %vm852, %v924, %v920
    %v926 = vlaneseq
    %v927 = vshrl.u32 %v926, 7
    %v928 = vsub.s32 %v842, %v927
    %v929 = vrot.slane %v545, %v928
    %v930 = vlaneseq
    %v931 = vshrl.u32 %v930, 7
    %v932 = vsub.s32 %v847, %v931
    %v933 = vrot.slane %v548, %v932
    %v934 = vsel %vm852, %v933, %v929
    %v935 = vlaneseq
    %v936 = vshrl.u32 %v935, 7
    %v937 = vsub.s32 %v842, %v936
    %v938 = vrot.slane %v551, %v937
    %v939 = vlaneseq
    %v940 = vshrl.u32 %v939, 7
    %v941 = vsub.s32 %v847, %v940
    %v942 = vrot.slane %v554, %v941
    %v943 = vsel %vm852, %v942, %v938
    %v944 = vlaneseq
    %v945 = vshrl.u32 %v944, 7
    %v946 = vsub.s32 %v842, %v945
    %v947 = vrot.slane %v557, %v946
    %v948 = vlaneseq
    %v949 = vshrl.u32 %v948, 7
    %v950 = vsub.s32 %v847, %v949
    %v951 = vrot.slane %v560, %v950
    %v952 = vsel %vm852, %v951, %v947
    %v953 = vlaneseq
    %v954 = vshrl.u32 %v953, 7
    %v955 = vsub.s32 %v842, %v954
    %v956 = vrot.slane %v563, %v955
    %v957 = vlaneseq
    %v958 = vshrl.u32 %v957, 7
    %v959 = vsub.s32 %v847, %v958
    %v960 = vrot.slane %v566, %v959
    %v961 = vsel %vm852, %v960, %v956
    %v962 = vlaneseq
    %v963 = vshrl.u32 %v962, 7
    %v964 = vsub.s32 %v842, %v963
    %v965 = vrot.slane %v569, %v964
    %v966 = vlaneseq
    %v967 = vshrl.u32 %v966, 7
    %v968 = vsub.s32 %v847, %v967
    %v969 = vrot.slane %v572, %v968
    %v970 = vsel %vm852, %v969, %v965
    %v971 = vlaneseq
    %v972 = vshrl.u32 %v971, 7
    %v973 = vsub.s32 %v842, %v972
    %v974 = vrot.slane %v575, %v973
    %v975 = vlaneseq
    %v976 = vshrl.u32 %v975, 7
    %v977 = vsub.s32 %v847, %v976
    %v978 = vrot.slane %v578, %v977
    %v979 = vsel %vm852, %v978, %v974
    %v980 = vlaneseq
    %v981 = vshrl.u32 %v980, 7
    %v982 = vsub.s32 %v842, %v981
    %v983 = vrot.slane %v581, %v982
    %v984 = vlaneseq
    %v985 = vshrl.u32 %v984, 7
    %v986 = vsub.s32 %v847, %v985
    %v987 = vrot.slane %v584, %v986
    %v988 = vsel %vm852, %v987, %v983
    %vm989 = vcmask 1041409
    %v990 = vsel %vm989, %v862, %v853
    %vm991 = vcmask 1042434
    %v992 = vsel %vm991, %v871, %v990
    %vm993 = vcmask 1043459
    %v994 = vsel %vm993, %v880, %v992
    %vm995 = vcmask 1044484
    %v996 = vsel %vm995, %v889, %v994
    %vm997 = vcmask 1045509
    %v998 = vsel %vm997, %v898, %v996
    %vm999 = vcmask 1046534
    %v1000 = vsel %vm999, %v907, %v998
    %vm1001 = vcmask 1047559
    %v1002 = vsel %vm1001, %v916, %v1000
    %v1003 = vsel %vm989, %v934, %v925
    %v1004 = vsel %vm991, %v943, %v1003
    %v1005 = vsel %vm993, %v952, %v1004
    %v1006 = vsel %vm995, %v961, %v1005
    %v1007 = vsel %vm997, %v970, %v1006
    %v1008 = vsel %vm999, %v979, %v1007
    %v1009 = vsel %vm1001, %v988, %v1008
    %v1044 = vlaneseq
    %v1045 = vshrl.u32 %v1044, 7
    %v1046 = vsub.s32 %v842, %v1045
    %v1047 = vrot.slane %v715, %v1046
    %v1048 = vlaneseq
    %v1049 = vshrl.u32 %v1048, 7
    %v1050 = vsub.s32 %v847, %v1049
    %v1051 = vrot.slane %v718, %v1050
    %v1052 = vsel %vm852, %v1051, %v1047
    %v1053 = vlaneseq
    %v1054 = vshrl.u32 %v1053, 7
    %v1055 = vsub.s32 %v842, %v1054
    %v1056 = vrot.slane %v721, %v1055
    %v1057 = vlaneseq
    %v1058 = vshrl.u32 %v1057, 7
    %v1059 = vsub.s32 %v847, %v1058
    %v1060 = vrot.slane %v724, %v1059
    %v1061 = vsel %vm852, %v1060, %v1056
    %v1062 = vlaneseq
    %v1063 = vshrl.u32 %v1062, 7
    %v1064 = vsub.s32 %v842, %v1063
    %v1065 = vrot.slane %v727, %v1064
    %v1066 = vlaneseq
    %v1067 = vshrl.u32 %v1066, 7
    %v1068 = vsub.s32 %v847, %v1067
    %v1069 = vrot.slane %v730, %v1068
    %v1070 = vsel %vm852, %v1069, %v1065
    %v1071 = vlaneseq
    %v1072 = vshrl.u32 %v1071, 7
    %v1073 = vsub.s32 %v842, %v1072
    %v1074 = vrot.slane %v733, %v1073
    %v1075 = vlaneseq
    %v1076 = vshrl.u32 %v1075, 7
    %v1077 = vsub.s32 %v847, %v1076
    %v1078 = vrot.slane %v736, %v1077
    %v1079 = vsel %vm852, %v1078, %v1074
    %v1080 = vlaneseq
    %v1081 = vshrl.u32 %v1080, 7
    %v1082 = vsub.s32 %v842, %v1081
    %v1083 = vrot.slane %v739, %v1082
    %v1084 = vlaneseq
    %v1085 = vshrl.u32 %v1084, 7
    %v1086 = vsub.s32 %v847, %v1085
    %v1087 = vrot.slane %v742, %v1086
    %v1088 = vsel %vm852, %v1087, %v1083
    %v1089 = vlaneseq
    %v1090 = vshrl.u32 %v1089, 7
    %v1091 = vsub.s32 %v842, %v1090
    %v1092 = vrot.slane %v745, %v1091
    %v1093 = vlaneseq
    %v1094 = vshrl.u32 %v1093, 7
    %v1095 = vsub.s32 %v847, %v1094
    %v1096 = vrot.slane %v748, %v1095
    %v1097 = vsel %vm852, %v1096, %v1092
    %v1098 = vlaneseq
    %v1099 = vshrl.u32 %v1098, 7
    %v1100 = vsub.s32 %v842, %v1099
    %v1101 = vrot.slane %v751, %v1100
    %v1102 = vlaneseq
    %v1103 = vshrl.u32 %v1102, 7
    %v1104 = vsub.s32 %v847, %v1103
    %v1105 = vrot.slane %v754, %v1104
    %v1106 = vsel %vm852, %v1105, %v1101
    %v1107 = vlaneseq
    %v1108 = vshrl.u32 %v1107, 7
    %v1109 = vsub.s32 %v842, %v1108
    %v1110 = vrot.slane %v757, %v1109
    %v1111 = vlaneseq
    %v1112 = vshrl.u32 %v1111, 7
    %v1113 = vsub.s32 %v847, %v1112
    %v1114 = vrot.slane %v760, %v1113
    %v1115 = vsel %vm852, %v1114, %v1110
    %v1116 = vlaneseq
    %v1117 = vshrl.u32 %v1116, 7
    %v1118 = vsub.s32 %v842, %v1117
    %v1119 = vrot.slane %v763, %v1118
    %v1120 = vlaneseq
    %v1121 = vshrl.u32 %v1120, 7
    %v1122 = vsub.s32 %v847, %v1121
    %v1123 = vrot.slane %v766, %v1122
    %v1124 = vsel %vm852, %v1123, %v1119
    %v1125 = vlaneseq
    %v1126 = vshrl.u32 %v1125, 7
    %v1127 = vsub.s32 %v842, %v1126
    %v1128 = vrot.slane %v769, %v1127
    %v1129 = vlaneseq
    %v1130 = vshrl.u32 %v1129, 7
    %v1131 = vsub.s32 %v847, %v1130
    %v1132 = vrot.slane %v772, %v1131
    %v1133 = vsel %vm852, %v1132, %v1128
    %v1134 = vlaneseq
    %v1135 = vshrl.u32 %v1134, 7
    %v1136 = vsub.s32 %v842, %v1135
    %v1137 = vrot.slane %v775, %v1136
    %v1138 = vlaneseq
    %v1139 = vshrl.u32 %v1138, 7
    %v1140 = vsub.s32 %v847, %v1139
    %v1141 = vrot.slane %v778, %v1140
    %v1142 = vsel %vm852, %v1141, %v1137
    %v1143 = vlaneseq
    %v1144 = vshrl.u32 %v1143, 7
    %v1145 = vsub.s32 %v842, %v1144
    %v1146 = vrot.slane %v781, %v1145
    %v1147 = vlaneseq
    %v1148 = vshrl.u32 %v1147, 7
    %v1149 = vsub.s32 %v847, %v1148
    %v1150 = vrot.slane %v784, %v1149
    %v1151 = vsel %vm852, %v1150, %v1146
    %v1152 = vlaneseq
    %v1153 = vshrl.u32 %v1152, 7
    %v1154 = vsub.s32 %v842, %v1153
    %v1155 = vrot.slane %v787, %v1154
    %v1156 = vlaneseq
    %v1157 = vshrl.u32 %v1156, 7
    %v1158 = vsub.s32 %v847, %v1157
    %v1159 = vrot.slane %v790, %v1158
    %v1160 = vsel %vm852, %v1159, %v1155
    %v1161 = vlaneseq
    %v1162 = vshrl.u32 %v1161, 7
    %v1163 = vsub.s32 %v842, %v1162
    %v1164 = vrot.slane %v793, %v1163
    %v1165 = vlaneseq
    %v1166 = vshrl.u32 %v1165, 7
    %v1167 = vsub.s32 %v847, %v1166
    %v1168 = vrot.slane %v796, %v1167
    %v1169 = vsel %vm852, %v1168, %v1164
    %v1170 = vlaneseq
    %v1171 = vshrl.u32 %v1170, 7
    %v1172 = vsub.s32 %v842, %v1171
    %v1173 = vrot.slane %v799, %v1172
    %v1174 = vlaneseq
    %v1175 = vshrl.u32 %v1174, 7
    %v1176 = vsub.s32 %v847, %v1175
    %v1177 = vrot.slane %v802, %v1176
    %v1178 = vsel %vm852, %v1177, %v1173
    %v1179 = vlaneseq
    %v1180 = vshrl.u32 %v1179, 7
    %v1181 = vsub.s32 %v842, %v1180
    %v1182 = vrot.slane %v805, %v1181
    %v1183 = vlaneseq
    %v1184 = vshrl.u32 %v1183, 7
    %v1185 = vsub.s32 %v847, %v1184
    %v1186 = vrot.slane %v808, %v1185
    %v1187 = vsel %vm852, %v1186, %v1182
    %v1188 = vsel %vm989, %v1061, %v1052
    %v1189 = vsel %vm991, %v1070, %v1188
    %v1190 = vsel %vm993, %v1079, %v1189
    %v1191 = vsel %vm995, %v1088, %v1190
    %v1192 = vsel %vm997, %v1097, %v1191
    %v1193 = vsel %vm999, %v1106, %v1192
    %v1194 = vsel %vm1001, %v1115, %v1193
    %v1195 = vsel %vm989, %v1133, %v1124
    %v1196 = vsel %vm991, %v1142, %v1195
    %v1197 = vsel %vm993, %v1151, %v1196
    %v1198 = vsel %vm995, %v1160, %v1197
    %v1199 = vsel %vm997, %v1169, %v1198
    %v1200 = vsel %vm999, %v1178, %v1199
    %v1201 = vsel %vm1001, %v1187, %v1200
    %v1204 = vadd.f32 %v1002, %v28
    %v1205 = vadd.f32 %v1009, %v29
    %v1206 = vadd.f32 %v1194, %v30
    %v1207 = vadd.f32 %v1201, %v31
    %vm1208 = vcmask 130048
    %v1209 = vsel %vm1208, %v1204, -inf
    %1210 = vmax.xlane.f32.xlu0 %v1209
    %v1211 = vpop.xlane.xlu0 %1210
    %v1212 = vsel %vm1208, %v1205, -inf
    %1213 = vmax.xlane.f32.xlu0 %v1212
    %v1214 = vpop.xlane.xlu0 %1213
    %v1215 = vsel %vm1208, %v1206, -inf
    %1216 = vmax.xlane.f32.xlu0 %v1215
    %v1217 = vpop.xlane.xlu0 %1216
    %v1218 = vsel %vm1208, %v1207, -inf
    %1219 = vmax.xlane.f32.xlu0 %v1218
    %v1220 = vpop.xlane.xlu0 %1219
    %v1221 = vsub.f32 %v1204, %v1211
    %v1222 = vsub.f32 %v1205, %v1214
    %v1223 = vsub.f32 %v1206, %v1217
    %v1224 = vsub.f32 %v1207, %v1220
    %v1225 = vmul.f32 %v1221, 1.442695
    %v1226 = vpow.pop %v1225
    %v1227 = vmul.f32 %v1222, 1.442695
    %v1228 = vpow.pop %v1227
    %v1229 = vmul.f32 %v1223, 1.442695
    %v1230 = vpow.pop %v1229
    %v1231 = vmul.f32 %v1224, 1.442695
    %v1232 = vpow.pop %v1231
    %v1233 = vsel %vm1208, %v1226, 0.0
    %1234 = vadd.xlane.f32.xlu0 %v1233
    %v1235 = vpop.xlane.xlu0 %1234
    %v1236 = vsel %vm1208, %v1228, 0.0
    %1237 = vadd.xlane.f32.xlu0 %v1236
    %v1238 = vpop.xlane.xlu0 %1237
    %v1239 = vsel %vm1208, %v1230, 0.0
    %1240 = vadd.xlane.f32.xlu0 %v1239
    %v1241 = vpop.xlane.xlu0 %1240
    %v1242 = vsel %vm1208, %v1232, 0.0
    %1243 = vadd.xlane.f32.xlu0 %v1242
    %v1244 = vpop.xlane.xlu0 %1243
    %v1245 = vrcp.pop %v1235
    %v1246 = vrcp.pop %v1238
    %v1247 = vrcp.pop %v1241
    %v1248 = vrcp.pop %v1244
    %v1249 = vmul.f32 %v1235, %v1245
    %v1250 = vmul.f32 %v1238, %v1246
    %v1251 = vmul.f32 %v1241, %v1247
    %v1252 = vmul.f32 %v1244, %v1248
    %v1253 = vsub.f32 2.0, %v1249
    %v1254 = vsub.f32 2.0, %v1250
    %v1255 = vsub.f32 2.0, %v1251
    %v1256 = vsub.f32 2.0, %v1252
    %v1257 = vmul.f32 %v1245, %v1253
    %v1258 = vmul.f32 %v1246, %v1254
    %v1259 = vmul.f32 %v1247, %v1255
    %v1260 = vmul.f32 %v1248, %v1256
    %v1261 = vmul.f32 %v1257, 0.5
    %v1262 = vmul.f32 %v1258, 0.5
    %v1263 = vmul.f32 %v1259, 0.5
    %v1264 = vmul.f32 %v1260, 0.5
    %v1265 = vmul.f32 %v1226, %v1261
    %v1266 = vmul.f32 %v1228, %v1262
    %v1267 = vmul.f32 %v1230, %v1263
    %v1268 = vmul.f32 %v1232, %v1264
    %v1270 = vsel %vm1208, %v1265, 0
    %v1273 = vsel %vm1208, %v1266, 0
    %v1276 = vsel %vm1208, %v1267, 0
    %v1279 = vsel %vm1208, %v1268, 0
    %1281 = vmatprep.subr.mxu0 0.0
    %1282 = vmatpush1.msra.mxu0 %v163
    %1283 = vmatprep.subr.mxu0 0.0
    %1284 = vmatpush1.msra.mxu0 %v169
    %1285 = vmatprep.subr.mxu0 0.0
    %1286 = vmatpush1.msra.mxu0 0.0
    %1287 = vmatprep.subr.mxu0 0.0
    %1288 = vmatpush1.msra.mxu0 0.0
    %1289 = vmatprep.subr.mxu0 0.0
    %1290 = vmatpush1.msra.mxu0 0.0
    %1291 = vmatprep.subr.mxu0 0.0
    %1292 = vmatpush1.msra.mxu0 0.0
    %1293 = vmatprep.subr.mxu0 0.0
    %1294 = vmatpush1.msra.mxu0 0.0
    %1295 = vmatprep.subr.mxu0 0.0
    %1296 = vmatpush1.msra.mxu0 0.0
    %1297 = vmatprep.subr.mxu0 0.0
    %1298 = vmatpush1.msra.mxu0 0.0
    %1299 = vmatprep.subr.mxu0 0.0
    %1300 = vmatpush1.msra.mxu0 0.0
    %1301 = vmatprep.subr.mxu0 0.0
    %1302 = vmatpush1.msra.mxu0 0.0
    %1303 = vmatprep.subr.mxu0 0.0
    %1304 = vmatpush1.msra.mxu0 0.0
    %1305 = vmatprep.subr.mxu0 0.0
    %1306 = vmatpush1.msra.mxu0 0.0
    %1307 = vmatprep.subr.mxu0 0.0
    %1308 = vmatpush1.msra.mxu0 0.0
    %1309 = vmatprep.subr.mxu0 0.0
    %1310 = vmatpush1.msra.mxu0 0.0
    %1311 = vmatprep.subr.mxu0 0.0
    %1312 = vmatpush1.msra.mxu0 0.0
    %1313 = vmatprep.subr.mxu0 0.0
    %1314 = vmatpush1.msra.mxu0 0.0
    %1315 = vmatprep.subr.mxu0 0.0
    %1316 = vmatpush1.msra.mxu0 0.0
    %1317 = vmatprep.subr.mxu0 0.0
    %1318 = vmatpush1.msra.mxu0 0.0
    %1319 = vmatprep.subr.mxu0 0.0
    %1320 = vmatpush1.msra.mxu0 0.0
    %1321 = vmatprep.subr.mxu0 0.0
    %1322 = vmatpush1.msra.mxu0 0.0
    %1323 = vmatprep.subr.mxu0 0.0
    %1324 = vmatpush1.msra.mxu0 0.0
    %1325 = vmatprep.subr.mxu0 0.0
    %1326 = vmatpush1.msra.mxu0 0.0
    %1327 = vmatprep.subr.mxu0 0.0
    %1328 = vmatpush1.msra.mxu0 0.0
    %1329 = vmatprep.subr.mxu0 0.0
    %1330 = vmatpush1.msra.mxu0 0.0
    %1331 = vmatprep.subr.mxu0 0.0
    %1332 = vmatpush1.msra.mxu0 0.0
    %1333 = vmatprep.subr.mxu0 0.0
    %1334 = vmatpush1.msra.mxu0 0.0
    %1335 = vmatprep.subr.mxu0 0.0
    %1336 = vmatpush1.msra.mxu0 0.0
    %1337 = vmatprep.subr.mxu0 0.0
    %1338 = vmatpush1.msra.mxu0 0.0
    %1339 = vmatprep.subr.mxu0 0.0
    %1340 = vmatpush1.msra.mxu0 0.0
    %1341 = vmatprep.subr.mxu0 0.0
    %1342 = vmatpush1.msra.mxu0 0.0
    %1343 = vmatprep.subr.mxu0 0.0
    %1344 = vmatpush1.msra.mxu0 0.0
    %1345 = vmatprep.mubr.f32.mxu0 0.0
    %1346 = vmatmul.mubr.f32.gmra.mrb[0].mxu0 %v1270
    %v1347 = vpop.f32.mrb[0].mxu0
    %v1348 = vadd.f32 0.0, %v1347
    %v1349 = vpop.f32.mrb[0].mxu0
    %1350 = vmatprep.mubr.f32.mxu0 0.0
    %1351 = vmatmul.mubr.f32.gmra.mrb[0].mxu0 %v1273
    %v1352 = vpop.f32.mrb[0].mxu0
    %v1353 = vadd.f32 0.0, %v1352
    %v1354 = vpop.f32.mrb[0].mxu0
    %1355 = vmatprep.mubr.f32.mxu0 0.0
    %1356 = vmatmul.mubr.f32.gmra.mrb[0].mxu0 %v1276
    %v1357 = vpop.f32.mrb[0].mxu0
    %v1358 = vadd.f32 0.0, %v1357
    %v1359 = vpop.f32.mrb[0].mxu0
    %1360 = vmatprep.mubr.f32.mxu0 0.0
    %1361 = vmatmul.mubr.f32.gmra.mrb[0].mxu0 %v1279
    %v1362 = vpop.f32.mrb[0].mxu0
    %v1363 = vadd.f32 0.0, %v1362
    %v1364 = vpop.f32.mrb[0].mxu0
    %1365 = vdwg.mxu0
    %1368 = vrot.lane.b32.xlu0 %v1358, 96
    %v1369 = vpop.permute.xlu0 %1368
    %1370 = vrot.lane.b32.xlu0 %v1363, 96
    %v1371 = vpop.permute.xlu0 %1370
    %v1374 = vadd.f32 %v1348, %v1369
    %v1375 = vadd.f32 %v1353, %v1371
    %v1376 = vlaneseq
    %v1377 = vshrl.u32 %v1376, 7
    %v1378 = vsub.s32 3, %v1377
    %v1379 = vrot.slane %v40, %v1378
    %v1380 = vadd.f32 %v1374, %v1379
    %v1381 = vadd.f32 %v1375, %v1379
    %v1382 = vmul.f32 %v1380, 0.5
    %v1383 = vmul.f32 %v1381, 0.5
    %v1384 = vmul.f32 %v1380, 0.70710677
    %v1385 = vmul.f32 %v1381, 0.70710677
    %v1386 = verf.f32.pop %v1384
    %v1387 = verf.f32.pop %v1385
    %v1388 = vadd.f32 %v1386, 1.0
    %v1389 = vadd.f32 %v1387, 1.0
    %v1390 = vmul.f32 %v1382, %v1388
    %v1391 = vmul.f32 %v1383, %v1389
    %v1392 = vadd.f32 %v1390, %v26
    %v1393 = vadd.f32 %v1391, %v27
    %v1394 = vld [vmem:[#allocation2 + $0x40] sm:$0xff]
    %v1395 = vld [vmem:[#allocation2 + $0x48] sm:$0xff]
    %v1396 = vld [vmem:[#allocation2 + $0x50] sm:$0xff]
    %v1397 = vld [vmem:[#allocation2 + $0x58] sm:$0xff]
    %v1398 = vld [vmem:[#allocation2 + $0x60] sm:$0xff]
    %v1399 = vld [vmem:[#allocation2 + $0x68] sm:$0xff]
    %v1400 = vld [vmem:[#allocation2 + $0x70] sm:$0xff]
    %v1401 = vld [vmem:[#allocation2 + $0x78] sm:$0xff]
    %v1402 = vld [vmem:[#allocation2 + $0x90] sm:$0xff]
    %v1403 = vld [vmem:[#allocation2 + $0x98] sm:$0xff]
    %v1404 = vsel %vm42, %v1392, 0.0
    %1405 = vadd.xlane.f32.xlu0 %v1404
    %v1406 = vpop.xlane.xlu0 %1405
    %v1407 = vsel %vm42, %v1393, 0.0
    %1408 = vadd.xlane.f32.xlu0 %v1407
    %v1409 = vpop.xlane.xlu0 %1408
    %v1410 = vmul.f32 %v1406, %v49
    %v1411 = vmul.f32 %v1409, %v49
    %v1412 = vsub.f32 %v1392, %v1410
    %v1413 = vsub.f32 %v1393, %v1411
    %v1414 = vmul.f32 %v1412, %v1412
    %v1415 = vmul.f32 %v1413, %v1413
    %v1416 = vsel %vm42, %v1414, 0.0
    %1417 = vadd.xlane.f32.xlu0 %v1416
    %v1418 = vpop.xlane.xlu0 %1417
    %v1419 = vsel %vm42, %v1415, 0.0
    %1420 = vadd.xlane.f32.xlu0 %v1419
    %v1421 = vpop.xlane.xlu0 %1420
    %v1422 = vmul.f32 %v1418, %v49
    %v1423 = vmul.f32 %v1421, %v49
    %v1424 = vadd.f32 %v1422, 1e-05
    %v1425 = vadd.f32 %v1423, 1e-05
    %v1426 = vrsqrt.pop %v1424
    %v1427 = vrsqrt.pop %v1425
    %v1428 = vmul.f32 %v1412, %v1426
    %v1429 = vmul.f32 %v1413, %v1427
    %v1430 = vlaneseq
    %v1431 = vshrl.u32 %v1430, 7
    %v1432 = vsub.s32 0, %v1431
    %v1433 = vrot.slane %v1402, %v1432
    %v1434 = vmul.f32 %v1428, %v1433
    %v1435 = vmul.f32 %v1429, %v1433
    %v1436 = vlaneseq
    %v1437 = vshrl.u32 %v1436, 7
    %v1438 = vsub.s32 1, %v1437
    %v1439 = vrot.slane %v1402, %v1438
    %v1440 = vadd.f32 %v1434, %v1439
    %v1441 = vadd.f32 %v1435, %v1439
    %v1442 = vlaneseq
    %v1443 = vshrl.u32 %v1442, 7
    %v1444 = vsub.s32 2, %v1443
    %v1445 = vrot.slane %v1402, %v1444
    %v1446 = vlaneseq
    %v1447 = vshrl.u32 %v1446, 7
    %v1448 = vsub.s32 2, %v1447
    %v1449 = vrot.slane %v1403, %v1448
    %v1451 = vsel %vm42, %v1440, 0
    %v1454 = vsel %vm42, %v1441, 0
    %1456 = vmatprep.subr.mxu0 %v1395
    %1457 = vmatpush1.msra.mxu0 %v1394
    %1458 = vmatprep.subr.mxu0 %v1397
    %1459 = vmatpush1.msra.mxu0 %v1396
    %1460 = vmatprep.subr.mxu0 %v1399
    %1461 = vmatpush1.msra.mxu0 %v1398
    %1462 = vmatprep.subr.mxu0 %v1401
    %1463 = vmatpush1.msra.mxu0 %v1400
    %1464 = vmatprep.subr.mxu0 0.0
    %1465 = vmatpush1.msra.mxu0 0.0
    %1466 = vmatprep.subr.mxu0 0.0
    %1467 = vmatpush1.msra.mxu0 0.0
    %1468 = vmatprep.subr.mxu0 0.0
    %1469 = vmatpush1.msra.mxu0 0.0
    %1470 = vmatprep.subr.mxu0 0.0
    %1471 = vmatpush1.msra.mxu0 0.0
    %1472 = vmatprep.subr.mxu0 0.0
    %1473 = vmatpush1.msra.mxu0 0.0
    %1474 = vmatprep.subr.mxu0 0.0
    %1475 = vmatpush1.msra.mxu0 0.0
    %1476 = vmatprep.subr.mxu0 0.0
    %1477 = vmatpush1.msra.mxu0 0.0
    %1478 = vmatprep.subr.mxu0 0.0
    %1479 = vmatpush1.msra.mxu0 0.0
    %1480 = vmatprep.subr.mxu0 0.0
    %1481 = vmatpush1.msra.mxu0 0.0
    %1482 = vmatprep.subr.mxu0 0.0
    %1483 = vmatpush1.msra.mxu0 0.0
    %1484 = vmatprep.subr.mxu0 0.0
    %1485 = vmatpush1.msra.mxu0 0.0
    %1486 = vmatprep.subr.mxu0 0.0
    %1487 = vmatpush1.msra.mxu0 0.0
    %1488 = vmatprep.subr.mxu0 0.0
    %1489 = vmatpush1.msra.mxu0 0.0
    %1490 = vmatprep.subr.mxu0 0.0
    %1491 = vmatpush1.msra.mxu0 0.0
    %1492 = vmatprep.subr.mxu0 0.0
    %1493 = vmatpush1.msra.mxu0 0.0
    %1494 = vmatprep.subr.mxu0 0.0
    %1495 = vmatpush1.msra.mxu0 0.0
    %1496 = vmatprep.subr.mxu0 0.0
    %1497 = vmatpush1.msra.mxu0 0.0
    %1498 = vmatprep.subr.mxu0 0.0
    %1499 = vmatpush1.msra.mxu0 0.0
    %1500 = vmatprep.subr.mxu0 0.0
    %1501 = vmatpush1.msra.mxu0 0.0
    %1502 = vmatprep.subr.mxu0 0.0
    %1503 = vmatpush1.msra.mxu0 0.0
    %1504 = vmatprep.subr.mxu0 0.0
    %1505 = vmatpush1.msra.mxu0 0.0
    %1506 = vmatprep.subr.mxu0 0.0
    %1507 = vmatpush1.msra.mxu0 0.0
    %1508 = vmatprep.subr.mxu0 0.0
    %1509 = vmatpush1.msra.mxu0 0.0
    %1510 = vmatprep.subr.mxu0 0.0
    %1511 = vmatpush1.msra.mxu0 0.0
    %1512 = vmatprep.subr.mxu0 0.0
    %1513 = vmatpush1.msra.mxu0 0.0
    %1514 = vmatprep.subr.mxu0 0.0
    %1515 = vmatpush1.msra.mxu0 0.0
    %1516 = vmatprep.subr.mxu0 0.0
    %1517 = vmatpush1.msra.mxu0 0.0
    %1518 = vmatprep.subr.mxu0 0.0
    %1519 = vmatpush1.msra.mxu0 0.0
    %1520 = vmatprep.mubr.f32.mxu0 0.0
    %1521 = vmatmul.mubr.f32.gmra.mrb[0].mxu0 %v1451
    %v1522 = vpop.f32.mrb[0].mxu0
    %v1523 = vadd.f32 %v1445, %v1522
    %v1524 = vpop.f32.mrb[0].mxu0
    %v1525 = vadd.f32 %v1449, %v1524
    %1526 = vmatprep.mubr.f32.mxu0 0.0
    %1527 = vmatmul.mubr.f32.gmra.mrb[0].mxu0 %v1454
    %v1528 = vpop.f32.mrb[0].mxu0
    %v1529 = vadd.f32 %v1445, %v1528
    %v1530 = vpop.f32.mrb[0].mxu0
    %v1531 = vadd.f32 %v1449, %v1530
    %1532 = vdwg.mxu0
    %v1535 = vcombine.high %v1525, %v1525
    %v1537 = vunpack.c.l.s4 1966171168
    %v1538 = vunpack.c.0.s8 %v1537
    %v1539 = vlaneseq
    %v1540 = vshrl.u32 %v1539, 7
    %v1541 = vsub.s32 %v1538, %v1540
    %v1542 = vrot.slane %v1525, %v1541
    %v1544 = vunpack.c.l.s4 1966171168
    %v1545 = vunpack.c.0.s8 %v1544
    %v1546 = vlaneseq
    %v1547 = vshrl.u32 %v1546, 7
    %v1548 = vsub.s32 %v1545, %v1547
    %v1549 = vrot.slane %v1535, %v1548
    %v1550 = vcombine.high %v1542, %v1542
    %v1551 = vcombine.high %v1549, %v1549
    %v1553 = vunpack.c.l.s4 1966171168
    %v1554 = vunpack.c.0.s8 %v1553
    %v1555 = vlaneseq
    %v1556 = vshrl.u32 %v1555, 7
    %v1557 = vsub.s32 %v1554, %v1556
    %v1558 = vrot.slane %v1542, %v1557
    %v1560 = vunpack.c.l.s4 1966171168
    %v1561 = vunpack.c.0.s8 %v1560
    %v1562 = vlaneseq
    %v1563 = vshrl.u32 %v1562, 7
    %v1564 = vsub.s32 %v1561, %v1563
    %v1565 = vrot.slane %v1549, %v1564
    %v1567 = vunpack.c.l.s4 1966171168
    %v1568 = vunpack.c.0.s8 %v1567
    %v1569 = vlaneseq
    %v1570 = vshrl.u32 %v1569, 7
    %v1571 = vsub.s32 %v1568, %v1570
    %v1572 = vrot.slane %v1550, %v1571
    %v1574 = vunpack.c.l.s4 1966171168
    %v1575 = vunpack.c.0.s8 %v1574
    %v1576 = vlaneseq
    %v1577 = vshrl.u32 %v1576, 7
    %v1578 = vsub.s32 %v1575, %v1577
    %v1579 = vrot.slane %v1551, %v1578
    %v1580 = vcombine.high %v1558, %v1558
    %v1581 = vcombine.high %v1565, %v1565
    %v1582 = vcombine.high %v1572, %v1572
    %v1583 = vcombine.high %v1579, %v1579
    %v1584 = vcombine.high %v1531, %v1531
    %v1586 = vunpack.c.l.s4 1966171168
    %v1587 = vunpack.c.0.s8 %v1586
    %v1588 = vlaneseq
    %v1589 = vshrl.u32 %v1588, 7
    %v1590 = vsub.s32 %v1587, %v1589
    %v1591 = vrot.slane %v1531, %v1590
    %v1593 = vunpack.c.l.s4 1966171168
    %v1594 = vunpack.c.0.s8 %v1593
    %v1595 = vlaneseq
    %v1596 = vshrl.u32 %v1595, 7
    %v1597 = vsub.s32 %v1594, %v1596
    %v1598 = vrot.slane %v1584, %v1597
    %v1599 = vcombine.high %v1591, %v1591
    %v1600 = vcombine.high %v1598, %v1598
    %v1602 = vunpack.c.l.s4 1966171168
    %v1603 = vunpack.c.0.s8 %v1602
    %v1604 = vlaneseq
    %v1605 = vshrl.u32 %v1604, 7
    %v1606 = vsub.s32 %v1603, %v1605
    %v1607 = vrot.slane %v1591, %v1606
    %v1609 = vunpack.c.l.s4 1966171168
    %v1610 = vunpack.c.0.s8 %v1609
    %v1611 = vlaneseq
    %v1612 = vshrl.u32 %v1611, 7
    %v1613 = vsub.s32 %v1610, %v1612
    %v1614 = vrot.slane %v1598, %v1613
    %v1616 = vunpack.c.l.s4 1966171168
    %v1617 = vunpack.c.0.s8 %v1616
    %v1618 = vlaneseq
    %v1619 = vshrl.u32 %v1618, 7
    %v1620 = vsub.s32 %v1617, %v1619
    %v1621 = vrot.slane %v1599, %v1620
    %v1623 = vunpack.c.l.s4 1966171168
    %v1624 = vunpack.c.0.s8 %v1623
    %v1625 = vlaneseq
    %v1626 = vshrl.u32 %v1625, 7
    %v1627 = vsub.s32 %v1624, %v1626
    %v1628 = vrot.slane %v1600, %v1627
    %v1629 = vcombine.high %v1607, %v1607
    %v1630 = vcombine.high %v1614, %v1614
    %v1631 = vcombine.high %v1621, %v1621
    %v1632 = vcombine.high %v1628, %v1628
    %v1633 = vlaneseq
    %v1634 = vshrl.u32 %v1633, 7
    %v1635 = vsub.s32 0, %v1634
    %v1636 = vrot.slane %v1558, %v1635
    %v1637 = vlaneseq
    %v1638 = vshrl.u32 %v1637, 7
    %v1639 = vsub.s32 0, %v1638
    %v1640 = vrot.slane %v1572, %v1639
    %v1641 = vlaneseq
    %v1642 = vshrl.u32 %v1641, 7
    %v1643 = vsub.s32 0, %v1642
    %v1644 = vrot.slane %v1580, %v1643
    %v1645 = vlaneseq
    %v1646 = vshrl.u32 %v1645, 7
    %v1647 = vsub.s32 0, %v1646
    %v1648 = vrot.slane %v1582, %v1647
    %v1649 = vlaneseq
    %v1650 = vshrl.u32 %v1649, 7
    %v1651 = vsub.s32 0, %v1650
    %v1652 = vrot.slane %v1565, %v1651
    %v1653 = vlaneseq
    %v1654 = vshrl.u32 %v1653, 7
    %v1655 = vsub.s32 0, %v1654
    %v1656 = vrot.slane %v1579, %v1655
    %v1657 = vlaneseq
    %v1658 = vshrl.u32 %v1657, 7
    %v1659 = vsub.s32 0, %v1658
    %v1660 = vrot.slane %v1581, %v1659
    %v1661 = vlaneseq
    %v1662 = vshrl.u32 %v1661, 7
    %v1663 = vsub.s32 0, %v1662
    %v1664 = vrot.slane %v1583, %v1663
    %v1665 = vlaneseq
    %v1666 = vshrl.u32 %v1665, 7
    %v1667 = vsub.s32 0, %v1666
    %v1668 = vrot.slane %v1607, %v1667
    %v1669 = vlaneseq
    %v1670 = vshrl.u32 %v1669, 7
    %v1671 = vsub.s32 0, %v1670
    %v1672 = vrot.slane %v1621, %v1671
    %v1673 = vlaneseq
    %v1674 = vshrl.u32 %v1673, 7
    %v1675 = vsub.s32 0, %v1674
    %v1676 = vrot.slane %v1629, %v1675
    %v1677 = vlaneseq
    %v1678 = vshrl.u32 %v1677, 7
    %v1679 = vsub.s32 0, %v1678
    %v1680 = vrot.slane %v1631, %v1679
    %v1681 = vlaneseq
    %v1682 = vshrl.u32 %v1681, 7
    %v1683 = vsub.s32 0, %v1682
    %v1684 = vrot.slane %v1614, %v1683
    %v1685 = vlaneseq
    %v1686 = vshrl.u32 %v1685, 7
    %v1687 = vsub.s32 0, %v1686
    %v1688 = vrot.slane %v1628, %v1687
    %v1689 = vlaneseq
    %v1690 = vshrl.u32 %v1689, 7
    %v1691 = vsub.s32 0, %v1690
    %v1692 = vrot.slane %v1630, %v1691
    %v1693 = vlaneseq
    %v1694 = vshrl.u32 %v1693, 7
    %v1695 = vsub.s32 0, %v1694
    %v1696 = vrot.slane %v1632, %v1695
    %v1713 = vadd.f32 %v1636, %v1523
    %v1714 = vadd.f32 %v1636, %v1529
    %v1715 = vadd.f32 %v1640, %v1523
    %v1716 = vadd.f32 %v1640, %v1529
    %v1717 = vadd.f32 %v1644, %v1523
    %v1718 = vadd.f32 %v1644, %v1529
    %v1719 = vadd.f32 %v1648, %v1523
    %v1720 = vadd.f32 %v1648, %v1529
    %v1721 = vadd.f32 %v1652, %v1523
    %v1722 = vadd.f32 %v1652, %v1529
    %v1723 = vadd.f32 %v1656, %v1523
    %v1724 = vadd.f32 %v1656, %v1529
    %v1725 = vadd.f32 %v1660, %v1523
    %v1726 = vadd.f32 %v1660, %v1529
    %v1727 = vadd.f32 %v1664, %v1523
    %v1728 = vadd.f32 %v1664, %v1529
    %v1729 = vadd.f32 %v1668, %v1523
    %v1730 = vadd.f32 %v1668, %v1529
    %v1731 = vadd.f32 %v1672, %v1523
    %v1732 = vadd.f32 %v1672, %v1529
    %v1733 = vadd.f32 %v1676, %v1523
    %v1734 = vadd.f32 %v1676, %v1529
    %v1735 = vadd.f32 %v1680, %v1523
    %v1736 = vadd.f32 %v1680, %v1529
    %v1737 = vadd.f32 %v1684, %v1523
    %v1738 = vadd.f32 %v1684, %v1529
    %v1739 = vadd.f32 %v1688, %v1523
    %v1740 = vadd.f32 %v1688, %v1529
    %v1741 = vadd.f32 %v1692, %v1523
    %v1742 = vadd.f32 %v1692, %v1529
    %v1743 = vadd.f32 %v1696, %v1523
    %v1744 = vadd.f32 %v1696, %v1529
    %vm1745 = vcmp.gt.f32.partialorder %v1713, 0.0
    %vm1746 = vcmp.gt.f32.partialorder %v1714, 0.0
    %vm1747 = vcmp.gt.f32.partialorder %v1715, 0.0
    %vm1748 = vcmp.gt.f32.partialorder %v1716, 0.0
    %vm1749 = vcmp.gt.f32.partialorder %v1717, 0.0
    %vm1750 = vcmp.gt.f32.partialorder %v1718, 0.0
    %vm1751 = vcmp.gt.f32.partialorder %v1719, 0.0
    %vm1752 = vcmp.gt.f32.partialorder %v1720, 0.0
    %vm1753 = vcmp.gt.f32.partialorder %v1721, 0.0
    %vm1754 = vcmp.gt.f32.partialorder %v1722, 0.0
    %vm1755 = vcmp.gt.f32.partialorder %v1723, 0.0
    %vm1756 = vcmp.gt.f32.partialorder %v1724, 0.0
    %vm1757 = vcmp.gt.f32.partialorder %v1725, 0.0
    %vm1758 = vcmp.gt.f32.partialorder %v1726, 0.0
    %vm1759 = vcmp.gt.f32.partialorder %v1727, 0.0
    %vm1760 = vcmp.gt.f32.partialorder %v1728, 0.0
    %vm1761 = vcmp.gt.f32.partialorder %v1729, 0.0
    %vm1762 = vcmp.gt.f32.partialorder %v1730, 0.0
    %vm1763 = vcmp.gt.f32.partialorder %v1731, 0.0
    %vm1764 = vcmp.gt.f32.partialorder %v1732, 0.0
    %vm1765 = vcmp.gt.f32.partialorder %v1733, 0.0
    %vm1766 = vcmp.gt.f32.partialorder %v1734, 0.0
    %vm1767 = vcmp.gt.f32.partialorder %v1735, 0.0
    %vm1768 = vcmp.gt.f32.partialorder %v1736, 0.0
    %vm1769 = vcmp.gt.f32.partialorder %v1737, 0.0
    %vm1770 = vcmp.gt.f32.partialorder %v1738, 0.0
    %vm1771 = vcmp.gt.f32.partialorder %v1739, 0.0
    %vm1772 = vcmp.gt.f32.partialorder %v1740, 0.0
    %vm1773 = vcmp.gt.f32.partialorder %v1741, 0.0
    %vm1774 = vcmp.gt.f32.partialorder %v1742, 0.0
    %vm1775 = vcmp.gt.f32.partialorder %v1743, 0.0
    %vm1776 = vcmp.gt.f32.partialorder %v1744, 0.0
    %v1777 = vlaneseq
    %v1778 = vshrl.u32 %v1777, 7
    %v1779 = vsub.s32 4, %v1778
    %v1780 = vrot.slane %v1402, %v1779
    %v1781 = vlaneseq
    %v1782 = vshrl.u32 %v1781, 7
    %v1783 = vsub.s32 5, %v1782
    %v1784 = vrot.slane %v1402, %v1783
    %v1785 = vsel %vm1745, %v1780, %v1784
    %v1786 = vsel %vm1746, %v1780, %v1784
    %v1787 = vsel %vm1747, %v1780, %v1784
    %v1788 = vsel %vm1748, %v1780, %v1784
    %v1789 = vsel %vm1749, %v1780, %v1784
    %v1790 = vsel %vm1750, %v1780, %v1784
    %v1791 = vsel %vm1751, %v1780, %v1784
    %v1792 = vsel %vm1752, %v1780, %v1784
    %v1793 = vsel %vm1753, %v1780, %v1784
    %v1794 = vsel %vm1754, %v1780, %v1784
    %v1795 = vsel %vm1755, %v1780, %v1784
    %v1796 = vsel %vm1756, %v1780, %v1784
    %v1797 = vsel %vm1757, %v1780, %v1784
    %v1798 = vsel %vm1758, %v1780, %v1784
    %v1799 = vsel %vm1759, %v1780, %v1784
    %v1800 = vsel %vm1760, %v1780, %v1784
    %v1801 = vsel %vm1761, %v1780, %v1784
    %v1802 = vsel %vm1762, %v1780, %v1784
    %v1803 = vsel %vm1763, %v1780, %v1784
    %v1804 = vsel %vm1764, %v1780, %v1784
    %v1805 = vsel %vm1765, %v1780, %v1784
    %v1806 = vsel %vm1766, %v1780, %v1784
    %v1807 = vsel %vm1767, %v1780, %v1784
    %v1808 = vsel %vm1768, %v1780, %v1784
    %v1809 = vsel %vm1769, %v1780, %v1784
    %v1810 = vsel %vm1770, %v1780, %v1784
    %v1811 = vsel %vm1771, %v1780, %v1784
    %v1812 = vsel %vm1772, %v1780, %v1784
    %v1813 = vsel %vm1773, %v1780, %v1784
    %v1814 = vsel %vm1774, %v1780, %v1784
    %v1815 = vsel %vm1775, %v1780, %v1784
    %v1816 = vsel %vm1776, %v1780, %v1784
    %v1817 = vmul.f32 %v1713, %v1785
    %v1818 = vmul.f32 %v1714, %v1786
    %v1819 = vmul.f32 %v1715, %v1787
    %v1820 = vmul.f32 %v1716, %v1788
    %v1821 = vmul.f32 %v1717, %v1789
    %v1822 = vmul.f32 %v1718, %v1790
    %v1823 = vmul.f32 %v1719, %v1791
    %v1824 = vmul.f32 %v1720, %v1792
    %v1825 = vmul.f32 %v1721, %v1793
    %v1826 = vmul.f32 %v1722, %v1794
    %v1827 = vmul.f32 %v1723, %v1795
    %v1828 = vmul.f32 %v1724, %v1796
    %v1829 = vmul.f32 %v1725, %v1797
    %v1830 = vmul.f32 %v1726, %v1798
    %v1831 = vmul.f32 %v1727, %v1799
    %v1832 = vmul.f32 %v1728, %v1800
    %v1833 = vmul.f32 %v1729, %v1801
    %v1834 = vmul.f32 %v1730, %v1802
    %v1835 = vmul.f32 %v1731, %v1803
    %v1836 = vmul.f32 %v1732, %v1804
    %v1837 = vmul.f32 %v1733, %v1805
    %v1838 = vmul.f32 %v1734, %v1806
    %v1839 = vmul.f32 %v1735, %v1807
    %v1840 = vmul.f32 %v1736, %v1808
    %v1841 = vmul.f32 %v1737, %v1809
    %v1842 = vmul.f32 %v1738, %v1810
    %v1843 = vmul.f32 %v1739, %v1811
    %v1844 = vmul.f32 %v1740, %v1812
    %v1845 = vmul.f32 %v1741, %v1813
    %v1846 = vmul.f32 %v1742, %v1814
    %v1847 = vmul.f32 %v1743, %v1815
    %v1848 = vmul.f32 %v1744, %v1816
    %v1849 = vsel %vm42, %v1817, 0.0
    %1850 = vadd.xlane.f32.xlu0 %v1849
    %v1851 = vpop.xlane.xlu0 %1850
    %v1852 = vsel %vm42, %v1818, 0.0
    %1853 = vadd.xlane.f32.xlu0 %v1852
    %v1854 = vpop.xlane.xlu0 %1853
    %v1855 = vsel %vm42, %v1819, 0.0
    %1856 = vadd.xlane.f32.xlu0 %v1855
    %v1857 = vpop.xlane.xlu0 %1856
    %v1858 = vsel %vm42, %v1820, 0.0
    %1859 = vadd.xlane.f32.xlu0 %v1858
    %v1860 = vpop.xlane.xlu0 %1859
    %v1861 = vsel %vm42, %v1821, 0.0
    %1862 = vadd.xlane.f32.xlu0 %v1861
    %v1863 = vpop.xlane.xlu0 %1862
    %v1864 = vsel %vm42, %v1822, 0.0
    %1865 = vadd.xlane.f32.xlu0 %v1864
    %v1866 = vpop.xlane.xlu0 %1865
    %v1867 = vsel %vm42, %v1823, 0.0
    %1868 = vadd.xlane.f32.xlu0 %v1867
    %v1869 = vpop.xlane.xlu0 %1868
    %v1870 = vsel %vm42, %v1824, 0.0
    %1871 = vadd.xlane.f32.xlu0 %v1870
    %v1872 = vpop.xlane.xlu0 %1871
    %v1873 = vsel %vm42, %v1825, 0.0
    %1874 = vadd.xlane.f32.xlu0 %v1873
    %v1875 = vpop.xlane.xlu0 %1874
    %v1876 = vsel %vm42, %v1826, 0.0
    %1877 = vadd.xlane.f32.xlu0 %v1876
    %v1878 = vpop.xlane.xlu0 %1877
    %v1879 = vsel %vm42, %v1827, 0.0
    %1880 = vadd.xlane.f32.xlu0 %v1879
    %v1881 = vpop.xlane.xlu0 %1880
    %v1882 = vsel %vm42, %v1828, 0.0
    %1883 = vadd.xlane.f32.xlu0 %v1882
    %v1884 = vpop.xlane.xlu0 %1883
    %v1885 = vsel %vm42, %v1829, 0.0
    %1886 = vadd.xlane.f32.xlu0 %v1885
    %v1887 = vpop.xlane.xlu0 %1886
    %v1888 = vsel %vm42, %v1830, 0.0
    %1889 = vadd.xlane.f32.xlu0 %v1888
    %v1890 = vpop.xlane.xlu0 %1889
    %v1891 = vsel %vm42, %v1831, 0.0
    %1892 = vadd.xlane.f32.xlu0 %v1891
    %v1893 = vpop.xlane.xlu0 %1892
    %v1894 = vsel %vm42, %v1832, 0.0
    %1895 = vadd.xlane.f32.xlu0 %v1894
    %v1896 = vpop.xlane.xlu0 %1895
    %v1897 = vsel %vm42, %v1833, 0.0
    %1898 = vadd.xlane.f32.xlu0 %v1897
    %v1899 = vpop.xlane.xlu0 %1898
    %v1900 = vsel %vm42, %v1834, 0.0
    %1901 = vadd.xlane.f32.xlu0 %v1900
    %v1902 = vpop.xlane.xlu0 %1901
    %v1903 = vsel %vm42, %v1835, 0.0
    %1904 = vadd.xlane.f32.xlu0 %v1903
    %v1905 = vpop.xlane.xlu0 %1904
    %v1906 = vsel %vm42, %v1836, 0.0
    %1907 = vadd.xlane.f32.xlu0 %v1906
    %v1908 = vpop.xlane.xlu0 %1907
    %v1909 = vsel %vm42, %v1837, 0.0
    %1910 = vadd.xlane.f32.xlu0 %v1909
    %v1911 = vpop.xlane.xlu0 %1910
    %v1912 = vsel %vm42, %v1838, 0.0
    %1913 = vadd.xlane.f32.xlu0 %v1912
    %v1914 = vpop.xlane.xlu0 %1913
    %v1915 = vsel %vm42, %v1839, 0.0
    %1916 = vadd.xlane.f32.xlu0 %v1915
    %v1917 = vpop.xlane.xlu0 %1916
    %v1918 = vsel %vm42, %v1840, 0.0
    %1919 = vadd.xlane.f32.xlu0 %v1918
    %v1920 = vpop.xlane.xlu0 %1919
    %v1921 = vsel %vm42, %v1841, 0.0
    %1922 = vadd.xlane.f32.xlu0 %v1921
    %v1923 = vpop.xlane.xlu0 %1922
    %v1924 = vsel %vm42, %v1842, 0.0
    %1925 = vadd.xlane.f32.xlu0 %v1924
    %v1926 = vpop.xlane.xlu0 %1925
    %v1927 = vsel %vm42, %v1843, 0.0
    %1928 = vadd.xlane.f32.xlu0 %v1927
    %v1929 = vpop.xlane.xlu0 %1928
    %v1930 = vsel %vm42, %v1844, 0.0
    %1931 = vadd.xlane.f32.xlu0 %v1930
    %v1932 = vpop.xlane.xlu0 %1931
    %v1933 = vsel %vm42, %v1845, 0.0
    %1934 = vadd.xlane.f32.xlu0 %v1933
    %v1935 = vpop.xlane.xlu0 %1934
    %v1936 = vsel %vm42, %v1846, 0.0
    %1937 = vadd.xlane.f32.xlu0 %v1936
    %v1938 = vpop.xlane.xlu0 %1937
    %v1939 = vsel %vm42, %v1847, 0.0
    %1940 = vadd.xlane.f32.xlu0 %v1939
    %v1941 = vpop.xlane.xlu0 %1940
    %v1942 = vsel %vm42, %v1848, 0.0
    %1943 = vadd.xlane.f32.xlu0 %v1942
    %v1944 = vpop.xlane.xlu0 %1943
    %1977 = vrot.lane.b32.xlu0 %v1817, 96
    %v1978 = vpop.permute.xlu0 %1977
    %1979 = vrot.lane.b32.xlu0 %v1818, 96
    %v1980 = vpop.permute.xlu0 %1979
    %1981 = vrot.lane.b32.xlu0 %v1819, 96
    %v1982 = vpop.permute.xlu0 %1981
    %1983 = vrot.lane.b32.xlu0 %v1820, 96
    %v1984 = vpop.permute.xlu0 %1983
    %1985 = vrot.lane.b32.xlu0 %v1821, 96
    %v1986 = vpop.permute.xlu0 %1985
    %1987 = vrot.lane.b32.xlu0 %v1822, 96
    %v1988 = vpop.permute.xlu0 %1987
    %1989 = vrot.lane.b32.xlu0 %v1823, 96
    %v1990 = vpop.permute.xlu0 %1989
    %1991 = vrot.lane.b32.xlu0 %v1824, 96
    %v1992 = vpop.permute.xlu0 %1991
    %1993 = vrot.lane.b32.xlu0 %v1825, 96
    %v1994 = vpop.permute.xlu0 %1993
    %1995 = vrot.lane.b32.xlu0 %v1826, 96
    %v1996 = vpop.permute.xlu0 %1995
    %1997 = vrot.lane.b32.xlu0 %v1827, 96
    %v1998 = vpop.permute.xlu0 %1997
    %1999 = vrot.lane.b32.xlu0 %v1828, 96
    %v2000 = vpop.permute.xlu0 %1999
    %2001 = vrot.lane.b32.xlu0 %v1829, 96
    %v2002 = vpop.permute.xlu0 %2001
    %2003 = vrot.lane.b32.xlu0 %v1830, 96
    %v2004 = vpop.permute.xlu0 %2003
    %2005 = vrot.lane.b32.xlu0 %v1831, 96
    %v2006 = vpop.permute.xlu0 %2005
    %2007 = vrot.lane.b32.xlu0 %v1832, 96
    %v2008 = vpop.permute.xlu0 %2007
    %2009 = vrot.lane.b32.xlu0 %v1833, 96
    %v2010 = vpop.permute.xlu0 %2009
    %2011 = vrot.lane.b32.xlu0 %v1834, 96
    %v2012 = vpop.permute.xlu0 %2011
    %2013 = vrot.lane.b32.xlu0 %v1835, 96
    %v2014 = vpop.permute.xlu0 %2013
    %2015 = vrot.lane.b32.xlu0 %v1836, 96
    %v2016 = vpop.permute.xlu0 %2015
    %2017 = vrot.lane.b32.xlu0 %v1837, 96
    %v2018 = vpop.permute.xlu0 %2017
    %2019 = vrot.lane.b32.xlu0 %v1838, 96
    %v2020 = vpop.permute.xlu0 %2019
    %2021 = vrot.lane.b32.xlu0 %v1839, 96
    %v2022 = vpop.permute.xlu0 %2021
    %2023 = vrot.lane.b32.xlu0 %v1840, 96
    %v2024 = vpop.permute.xlu0 %2023
    %2025 = vrot.lane.b32.xlu0 %v1841, 96
    %v2026 = vpop.permute.xlu0 %2025
    %2027 = vrot.lane.b32.xlu0 %v1842, 96
    %v2028 = vpop.permute.xlu0 %2027
    %2029 = vrot.lane.b32.xlu0 %v1843, 96
    %v2030 = vpop.permute.xlu0 %2029
    %2031 = vrot.lane.b32.xlu0 %v1844, 96
    %v2032 = vpop.permute.xlu0 %2031
    %2033 = vrot.lane.b32.xlu0 %v1845, 96
    %v2034 = vpop.permute.xlu0 %2033
    %2035 = vrot.lane.b32.xlu0 %v1846, 96
    %v2036 = vpop.permute.xlu0 %2035
    %2037 = vrot.lane.b32.xlu0 %v1847, 96
    %v2038 = vpop.permute.xlu0 %2037
    %2039 = vrot.lane.b32.xlu0 %v1848, 96
    %v2040 = vpop.permute.xlu0 %2039
    %v2073 = vsel %vm42, %v1978, 0.0
    %2074 = vadd.xlane.f32.xlu0 %v2073
    %v2075 = vpop.xlane.xlu0 %2074
    %v2076 = vsel %vm42, %v1980, 0.0
    %2077 = vadd.xlane.f32.xlu0 %v2076
    %v2078 = vpop.xlane.xlu0 %2077
    %v2079 = vsel %vm42, %v1982, 0.0
    %2080 = vadd.xlane.f32.xlu0 %v2079
    %v2081 = vpop.xlane.xlu0 %2080
    %v2082 = vsel %vm42, %v1984, 0.0
    %2083 = vadd.xlane.f32.xlu0 %v2082
    %v2084 = vpop.xlane.xlu0 %2083
    %v2085 = vsel %vm42, %v1986, 0.0
    %2086 = vadd.xlane.f32.xlu0 %v2085
    %v2087 = vpop.xlane.xlu0 %2086
    %v2088 = vsel %vm42, %v1988, 0.0
    %2089 = vadd.xlane.f32.xlu0 %v2088
    %v2090 = vpop.xlane.xlu0 %2089
    %v2091 = vsel %vm42, %v1990, 0.0
    %2092 = vadd.xlane.f32.xlu0 %v2091
    %v2093 = vpop.xlane.xlu0 %2092
    %v2094 = vsel %vm42, %v1992, 0.0
    %2095 = vadd.xlane.f32.xlu0 %v2094
    %v2096 = vpop.xlane.xlu0 %2095
    %v2097 = vsel %vm42, %v1994, 0.0
    %2098 = vadd.xlane.f32.xlu0 %v2097
    %v2099 = vpop.xlane.xlu0 %2098
    %v2100 = vsel %vm42, %v1996, 0.0
    %2101 = vadd.xlane.f32.xlu0 %v2100
    %v2102 = vpop.xlane.xlu0 %2101
    %v2103 = vsel %vm42, %v1998, 0.0
    %2104 = vadd.xlane.f32.xlu0 %v2103
    %v2105 = vpop.xlane.xlu0 %2104
    %v2106 = vsel %vm42, %v2000, 0.0
    %2107 = vadd.xlane.f32.xlu0 %v2106
    %v2108 = vpop.xlane.xlu0 %2107
    %v2109 = vsel %vm42, %v2002, 0.0
    %2110 = vadd.xlane.f32.xlu0 %v2109
    %v2111 = vpop.xlane.xlu0 %2110
    %v2112 = vsel %vm42, %v2004, 0.0
    %2113 = vadd.xlane.f32.xlu0 %v2112
    %v2114 = vpop.xlane.xlu0 %2113
    %v2115 = vsel %vm42, %v2006, 0.0
    %2116 = vadd.xlane.f32.xlu0 %v2115
    %v2117 = vpop.xlane.xlu0 %2116
    %v2118 = vsel %vm42, %v2008, 0.0
    %2119 = vadd.xlane.f32.xlu0 %v2118
    %v2120 = vpop.xlane.xlu0 %2119
    %v2121 = vsel %vm42, %v2010, 0.0
    %2122 = vadd.xlane.f32.xlu0 %v2121
    %v2123 = vpop.xlane.xlu0 %2122
    %v2124 = vsel %vm42, %v2012, 0.0
    %2125 = vadd.xlane.f32.xlu0 %v2124
    %v2126 = vpop.xlane.xlu0 %2125
    %v2127 = vsel %vm42, %v2014, 0.0
    %2128 = vadd.xlane.f32.xlu0 %v2127
    %v2129 = vpop.xlane.xlu0 %2128
    %v2130 = vsel %vm42, %v2016, 0.0
    %2131 = vadd.xlane.f32.xlu0 %v2130
    %v2132 = vpop.xlane.xlu0 %2131
    %v2133 = vsel %vm42, %v2018, 0.0
    %2134 = vadd.xlane.f32.xlu0 %v2133
    %v2135 = vpop.xlane.xlu0 %2134
    %v2136 = vsel %vm42, %v2020, 0.0
    %2137 = vadd.xlane.f32.xlu0 %v2136
    %v2138 = vpop.xlane.xlu0 %2137
    %v2139 = vsel %vm42, %v2022, 0.0
    %2140 = vadd.xlane.f32.xlu0 %v2139
    %v2141 = vpop.xlane.xlu0 %2140
    %v2142 = vsel %vm42, %v2024, 0.0
    %2143 = vadd.xlane.f32.xlu0 %v2142
    %v2144 = vpop.xlane.xlu0 %2143
    %v2145 = vsel %vm42, %v2026, 0.0
    %2146 = vadd.xlane.f32.xlu0 %v2145
    %v2147 = vpop.xlane.xlu0 %2146
    %v2148 = vsel %vm42, %v2028, 0.0
    %2149 = vadd.xlane.f32.xlu0 %v2148
    %v2150 = vpop.xlane.xlu0 %2149
    %v2151 = vsel %vm42, %v2030, 0.0
    %2152 = vadd.xlane.f32.xlu0 %v2151
    %v2153 = vpop.xlane.xlu0 %2152
    %v2154 = vsel %vm42, %v2032, 0.0
    %2155 = vadd.xlane.f32.xlu0 %v2154
    %v2156 = vpop.xlane.xlu0 %2155
    %v2157 = vsel %vm42, %v2034, 0.0
    %2158 = vadd.xlane.f32.xlu0 %v2157
    %v2159 = vpop.xlane.xlu0 %2158
    %v2160 = vsel %vm42, %v2036, 0.0
    %2161 = vadd.xlane.f32.xlu0 %v2160
    %v2162 = vpop.xlane.xlu0 %2161
    %v2163 = vsel %vm42, %v2038, 0.0
    %2164 = vadd.xlane.f32.xlu0 %v2163
    %v2165 = vpop.xlane.xlu0 %2164
    %v2166 = vsel %vm42, %v2040, 0.0
    %2167 = vadd.xlane.f32.xlu0 %v2166
    %v2168 = vpop.xlane.xlu0 %2167
    %v2201 = vlaneseq
    %v2202 = vshrl.u32 %v2201, 7
    %v2203 = vsub.s32 %v842, %v2202
    %v2204 = vrot.slane %v1851, %v2203
    %v2205 = vlaneseq
    %v2206 = vshrl.u32 %v2205, 7
    %v2207 = vsub.s32 %v847, %v2206
    %v2208 = vrot.slane %v1854, %v2207
    %v2209 = vsel %vm852, %v2208, %v2204
    %v2210 = vlaneseq
    %v2211 = vshrl.u32 %v2210, 7
    %v2212 = vsub.s32 %v842, %v2211
    %v2213 = vrot.slane %v1857, %v2212
    %v2214 = vlaneseq
    %v2215 = vshrl.u32 %v2214, 7
    %v2216 = vsub.s32 %v847, %v2215
    %v2217 = vrot.slane %v1860, %v2216
    %v2218 = vsel %vm852, %v2217, %v2213
    %v2219 = vlaneseq
    %v2220 = vshrl.u32 %v2219, 7
    %v2221 = vsub.s32 %v842, %v2220
    %v2222 = vrot.slane %v1863, %v2221
    %v2223 = vlaneseq
    %v2224 = vshrl.u32 %v2223, 7
    %v2225 = vsub.s32 %v847, %v2224
    %v2226 = vrot.slane %v1866, %v2225
    %v2227 = vsel %vm852, %v2226, %v2222
    %v2228 = vlaneseq
    %v2229 = vshrl.u32 %v2228, 7
    %v2230 = vsub.s32 %v842, %v2229
    %v2231 = vrot.slane %v1869, %v2230
    %v2232 = vlaneseq
    %v2233 = vshrl.u32 %v2232, 7
    %v2234 = vsub.s32 %v847, %v2233
    %v2235 = vrot.slane %v1872, %v2234
    %v2236 = vsel %vm852, %v2235, %v2231
    %v2237 = vlaneseq
    %v2238 = vshrl.u32 %v2237, 7
    %v2239 = vsub.s32 %v842, %v2238
    %v2240 = vrot.slane %v1875, %v2239
    %v2241 = vlaneseq
    %v2242 = vshrl.u32 %v2241, 7
    %v2243 = vsub.s32 %v847, %v2242
    %v2244 = vrot.slane %v1878, %v2243
    %v2245 = vsel %vm852, %v2244, %v2240
    %v2246 = vlaneseq
    %v2247 = vshrl.u32 %v2246, 7
    %v2248 = vsub.s32 %v842, %v2247
    %v2249 = vrot.slane %v1881, %v2248
    %v2250 = vlaneseq
    %v2251 = vshrl.u32 %v2250, 7
    %v2252 = vsub.s32 %v847, %v2251
    %v2253 = vrot.slane %v1884, %v2252
    %v2254 = vsel %vm852, %v2253, %v2249
    %v2255 = vlaneseq
    %v2256 = vshrl.u32 %v2255, 7
    %v2257 = vsub.s32 %v842, %v2256
    %v2258 = vrot.slane %v1887, %v2257
    %v2259 = vlaneseq
    %v2260 = vshrl.u32 %v2259, 7
    %v2261 = vsub.s32 %v847, %v2260
    %v2262 = vrot.slane %v1890, %v2261
    %v2263 = vsel %vm852, %v2262, %v2258
    %v2264 = vlaneseq
    %v2265 = vshrl.u32 %v2264, 7
    %v2266 = vsub.s32 %v842, %v2265
    %v2267 = vrot.slane %v1893, %v2266
    %v2268 = vlaneseq
    %v2269 = vshrl.u32 %v2268, 7
    %v2270 = vsub.s32 %v847, %v2269
    %v2271 = vrot.slane %v1896, %v2270
    %v2272 = vsel %vm852, %v2271, %v2267
    %v2273 = vlaneseq
    %v2274 = vshrl.u32 %v2273, 7
    %v2275 = vsub.s32 %v842, %v2274
    %v2276 = vrot.slane %v1899, %v2275
    %v2277 = vlaneseq
    %v2278 = vshrl.u32 %v2277, 7
    %v2279 = vsub.s32 %v847, %v2278
    %v2280 = vrot.slane %v1902, %v2279
    %v2281 = vsel %vm852, %v2280, %v2276
    %v2282 = vlaneseq
    %v2283 = vshrl.u32 %v2282, 7
    %v2284 = vsub.s32 %v842, %v2283
    %v2285 = vrot.slane %v1905, %v2284
    %v2286 = vlaneseq
    %v2287 = vshrl.u32 %v2286, 7
    %v2288 = vsub.s32 %v847, %v2287
    %v2289 = vrot.slane %v1908, %v2288
    %v2290 = vsel %vm852, %v2289, %v2285
    %v2291 = vlaneseq
    %v2292 = vshrl.u32 %v2291, 7
    %v2293 = vsub.s32 %v842, %v2292
    %v2294 = vrot.slane %v1911, %v2293
    %v2295 = vlaneseq
    %v2296 = vshrl.u32 %v2295, 7
    %v2297 = vsub.s32 %v847, %v2296
    %v2298 = vrot.slane %v1914, %v2297
    %v2299 = vsel %vm852, %v2298, %v2294
    %v2300 = vlaneseq
    %v2301 = vshrl.u32 %v2300, 7
    %v2302 = vsub.s32 %v842, %v2301
    %v2303 = vrot.slane %v1917, %v2302
    %v2304 = vlaneseq
    %v2305 = vshrl.u32 %v2304, 7
    %v2306 = vsub.s32 %v847, %v2305
    %v2307 = vrot.slane %v1920, %v2306
    %v2308 = vsel %vm852, %v2307, %v2303
    %v2309 = vlaneseq
    %v2310 = vshrl.u32 %v2309, 7
    %v2311 = vsub.s32 %v842, %v2310
    %v2312 = vrot.slane %v1923, %v2311
    %v2313 = vlaneseq
    %v2314 = vshrl.u32 %v2313, 7
    %v2315 = vsub.s32 %v847, %v2314
    %v2316 = vrot.slane %v1926, %v2315
    %v2317 = vsel %vm852, %v2316, %v2312
    %v2318 = vlaneseq
    %v2319 = vshrl.u32 %v2318, 7
    %v2320 = vsub.s32 %v842, %v2319
    %v2321 = vrot.slane %v1929, %v2320
    %v2322 = vlaneseq
    %v2323 = vshrl.u32 %v2322, 7
    %v2324 = vsub.s32 %v847, %v2323
    %v2325 = vrot.slane %v1932, %v2324
    %v2326 = vsel %vm852, %v2325, %v2321
    %v2327 = vlaneseq
    %v2328 = vshrl.u32 %v2327, 7
    %v2329 = vsub.s32 %v842, %v2328
    %v2330 = vrot.slane %v1935, %v2329
    %v2331 = vlaneseq
    %v2332 = vshrl.u32 %v2331, 7
    %v2333 = vsub.s32 %v847, %v2332
    %v2334 = vrot.slane %v1938, %v2333
    %v2335 = vsel %vm852, %v2334, %v2330
    %v2336 = vlaneseq
    %v2337 = vshrl.u32 %v2336, 7
    %v2338 = vsub.s32 %v842, %v2337
    %v2339 = vrot.slane %v1941, %v2338
    %v2340 = vlaneseq
    %v2341 = vshrl.u32 %v2340, 7
    %v2342 = vsub.s32 %v847, %v2341
    %v2343 = vrot.slane %v1944, %v2342
    %v2344 = vsel %vm852, %v2343, %v2339
    %v2345 = vsel %vm989, %v2218, %v2209
    %v2346 = vsel %vm991, %v2227, %v2345
    %v2347 = vsel %vm993, %v2236, %v2346
    %v2348 = vsel %vm995, %v2245, %v2347
    %v2349 = vsel %vm997, %v2254, %v2348
    %v2350 = vsel %vm999, %v2263, %v2349
    %v2351 = vsel %vm1001, %v2272, %v2350
    %v2352 = vsel %vm989, %v2290, %v2281
    %v2353 = vsel %vm991, %v2299, %v2352
    %v2354 = vsel %vm993, %v2308, %v2353
    %v2355 = vsel %vm995, %v2317, %v2354
    %v2356 = vsel %vm997, %v2326, %v2355
    %v2357 = vsel %vm999, %v2335, %v2356
    %v2358 = vsel %vm1001, %v2344, %v2357
    %v2393 = vlaneseq
    %v2394 = vshrl.u32 %v2393, 7
    %v2395 = vsub.s32 %v842, %v2394
    %v2396 = vrot.slane %v2075, %v2395
    %v2397 = vlaneseq
    %v2398 = vshrl.u32 %v2397, 7
    %v2399 = vsub.s32 %v847, %v2398
    %v2400 = vrot.slane %v2078, %v2399
    %v2401 = vsel %vm852, %v2400, %v2396
    %v2402 = vlaneseq
    %v2403 = vshrl.u32 %v2402, 7
    %v2404 = vsub.s32 %v842, %v2403
    %v2405 = vrot.slane %v2081, %v2404
    %v2406 = vlaneseq
    %v2407 = vshrl.u32 %v2406, 7
    %v2408 = vsub.s32 %v847, %v2407
    %v2409 = vrot.slane %v2084, %v2408
    %v2410 = vsel %vm852, %v2409, %v2405
    %v2411 = vlaneseq
    %v2412 = vshrl.u32 %v2411, 7
    %v2413 = vsub.s32 %v842, %v2412
    %v2414 = vrot.slane %v2087, %v2413
    %v2415 = vlaneseq
    %v2416 = vshrl.u32 %v2415, 7
    %v2417 = vsub.s32 %v847, %v2416
    %v2418 = vrot.slane %v2090, %v2417
    %v2419 = vsel %vm852, %v2418, %v2414
    %v2420 = vlaneseq
    %v2421 = vshrl.u32 %v2420, 7
    %v2422 = vsub.s32 %v842, %v2421
    %v2423 = vrot.slane %v2093, %v2422
    %v2424 = vlaneseq
    %v2425 = vshrl.u32 %v2424, 7
    %v2426 = vsub.s32 %v847, %v2425
    %v2427 = vrot.slane %v2096, %v2426
    %v2428 = vsel %vm852, %v2427, %v2423
    %v2429 = vlaneseq
    %v2430 = vshrl.u32 %v2429, 7
    %v2431 = vsub.s32 %v842, %v2430
    %v2432 = vrot.slane %v2099, %v2431
    %v2433 = vlaneseq
    %v2434 = vshrl.u32 %v2433, 7
    %v2435 = vsub.s32 %v847, %v2434
    %v2436 = vrot.slane %v2102, %v2435
    %v2437 = vsel %vm852, %v2436, %v2432
    %v2438 = vlaneseq
    %v2439 = vshrl.u32 %v2438, 7
    %v2440 = vsub.s32 %v842, %v2439
    %v2441 = vrot.slane %v2105, %v2440
    %v2442 = vlaneseq
    %v2443 = vshrl.u32 %v2442, 7
    %v2444 = vsub.s32 %v847, %v2443
    %v2445 = vrot.slane %v2108, %v2444
    %v2446 = vsel %vm852, %v2445, %v2441
    %v2447 = vlaneseq
    %v2448 = vshrl.u32 %v2447, 7
    %v2449 = vsub.s32 %v842, %v2448
    %v2450 = vrot.slane %v2111, %v2449
    %v2451 = vlaneseq
    %v2452 = vshrl.u32 %v2451, 7
    %v2453 = vsub.s32 %v847, %v2452
    %v2454 = vrot.slane %v2114, %v2453
    %v2455 = vsel %vm852, %v2454, %v2450
    %v2456 = vlaneseq
    %v2457 = vshrl.u32 %v2456, 7
    %v2458 = vsub.s32 %v842, %v2457
    %v2459 = vrot.slane %v2117, %v2458
    %v2460 = vlaneseq
    %v2461 = vshrl.u32 %v2460, 7
    %v2462 = vsub.s32 %v847, %v2461
    %v2463 = vrot.slane %v2120, %v2462
    %v2464 = vsel %vm852, %v2463, %v2459
    %v2465 = vlaneseq
    %v2466 = vshrl.u32 %v2465, 7
    %v2467 = vsub.s32 %v842, %v2466
    %v2468 = vrot.slane %v2123, %v2467
    %v2469 = vlaneseq
    %v2470 = vshrl.u32 %v2469, 7
    %v2471 = vsub.s32 %v847, %v2470
    %v2472 = vrot.slane %v2126, %v2471
    %v2473 = vsel %vm852, %v2472, %v2468
    %v2474 = vlaneseq
    %v2475 = vshrl.u32 %v2474, 7
    %v2476 = vsub.s32 %v842, %v2475
    %v2477 = vrot.slane %v2129, %v2476
    %v2478 = vlaneseq
    %v2479 = vshrl.u32 %v2478, 7
    %v2480 = vsub.s32 %v847, %v2479
    %v2481 = vrot.slane %v2132, %v2480
    %v2482 = vsel %vm852, %v2481, %v2477
    %v2483 = vlaneseq
    %v2484 = vshrl.u32 %v2483, 7
    %v2485 = vsub.s32 %v842, %v2484
    %v2486 = vrot.slane %v2135, %v2485
    %v2487 = vlaneseq
    %v2488 = vshrl.u32 %v2487, 7
    %v2489 = vsub.s32 %v847, %v2488
    %v2490 = vrot.slane %v2138, %v2489
    %v2491 = vsel %vm852, %v2490, %v2486
    %v2492 = vlaneseq
    %v2493 = vshrl.u32 %v2492, 7
    %v2494 = vsub.s32 %v842, %v2493
    %v2495 = vrot.slane %v2141, %v2494
    %v2496 = vlaneseq
    %v2497 = vshrl.u32 %v2496, 7
    %v2498 = vsub.s32 %v847, %v2497
    %v2499 = vrot.slane %v2144, %v2498
    %v2500 = vsel %vm852, %v2499, %v2495
    %v2501 = vlaneseq
    %v2502 = vshrl.u32 %v2501, 7
    %v2503 = vsub.s32 %v842, %v2502
    %v2504 = vrot.slane %v2147, %v2503
    %v2505 = vlaneseq
    %v2506 = vshrl.u32 %v2505, 7
    %v2507 = vsub.s32 %v847, %v2506
    %v2508 = vrot.slane %v2150, %v2507
    %v2509 = vsel %vm852, %v2508, %v2504
    %v2510 = vlaneseq
    %v2511 = vshrl.u32 %v2510, 7
    %v2512 = vsub.s32 %v842, %v2511
    %v2513 = vrot.slane %v2153, %v2512
    %v2514 = vlaneseq
    %v2515 = vshrl.u32 %v2514, 7
    %v2516 = vsub.s32 %v847, %v2515
    %v2517 = vrot.slane %v2156, %v2516
    %v2518 = vsel %vm852, %v2517, %v2513
    %v2519 = vlaneseq
    %v2520 = vshrl.u32 %v2519, 7
    %v2521 = vsub.s32 %v842, %v2520
    %v2522 = vrot.slane %v2159, %v2521
    %v2523 = vlaneseq
    %v2524 = vshrl.u32 %v2523, 7
    %v2525 = vsub.s32 %v847, %v2524
    %v2526 = vrot.slane %v2162, %v2525
    %v2527 = vsel %vm852, %v2526, %v2522
    %v2528 = vlaneseq
    %v2529 = vshrl.u32 %v2528, 7
    %v2530 = vsub.s32 %v842, %v2529
    %v2531 = vrot.slane %v2165, %v2530
    %v2532 = vlaneseq
    %v2533 = vshrl.u32 %v2532, 7
    %v2534 = vsub.s32 %v847, %v2533
    %v2535 = vrot.slane %v2168, %v2534
    %v2536 = vsel %vm852, %v2535, %v2531
    %v2537 = vsel %vm989, %v2410, %v2401
    %v2538 = vsel %vm991, %v2419, %v2537
    %v2539 = vsel %vm993, %v2428, %v2538
    %v2540 = vsel %vm995, %v2437, %v2539
    %v2541 = vsel %vm997, %v2446, %v2540
    %v2542 = vsel %vm999, %v2455, %v2541
    %v2543 = vsel %vm1001, %v2464, %v2542
    %v2544 = vsel %vm989, %v2482, %v2473
    %v2545 = vsel %vm991, %v2491, %v2544
    %v2546 = vsel %vm993, %v2500, %v2545
    %v2547 = vsel %vm995, %v2509, %v2546
    %v2548 = vsel %vm997, %v2518, %v2547
    %v2549 = vsel %vm999, %v2527, %v2548
    %v2550 = vsel %vm1001, %v2536, %v2549
    %v2553 = vadd.f32 %v2351, %v28
    %v2554 = vadd.f32 %v2358, %v29
    %v2555 = vadd.f32 %v2543, %v30
    %v2556 = vadd.f32 %v2550, %v31
    %v2557 = vsel %vm1208, %v2553, -inf
    %2558 = vmax.xlane.f32.xlu0 %v2557
    %v2559 = vpop.xlane.xlu0 %2558
    %v2560 = vsel %vm1208, %v2554, -inf
    %2561 = vmax.xlane.f32.xlu0 %v2560
    %v2562 = vpop.xlane.xlu0 %2561
    %v2563 = vsel %vm1208, %v2555, -inf
    %2564 = vmax.xlane.f32.xlu0 %v2563
    %v2565 = vpop.xlane.xlu0 %2564
    %v2566 = vsel %vm1208, %v2556, -inf
    %2567 = vmax.xlane.f32.xlu0 %v2566
    %v2568 = vpop.xlane.xlu0 %2567
    %v2569 = vsub.f32 %v2553, %v2559
    %v2570 = vsub.f32 %v2554, %v2562
    %v2571 = vsub.f32 %v2555, %v2565
    %v2572 = vsub.f32 %v2556, %v2568
    %v2573 = vmul.f32 %v2569, 1.442695
    %v2574 = vpow.pop %v2573
    %v2575 = vmul.f32 %v2570, 1.442695
    %v2576 = vpow.pop %v2575
    %v2577 = vmul.f32 %v2571, 1.442695
    %v2578 = vpow.pop %v2577
    %v2579 = vmul.f32 %v2572, 1.442695
    %v2580 = vpow.pop %v2579
    %v2581 = vsel %vm1208, %v2574, 0.0
    %2582 = vadd.xlane.f32.xlu0 %v2581
    %v2583 = vpop.xlane.xlu0 %2582
    %v2584 = vsel %vm1208, %v2576, 0.0
    %2585 = vadd.xlane.f32.xlu0 %v2584
    %v2586 = vpop.xlane.xlu0 %2585
    %v2587 = vsel %vm1208, %v2578, 0.0
    %2588 = vadd.xlane.f32.xlu0 %v2587
    %v2589 = vpop.xlane.xlu0 %2588
    %v2590 = vsel %vm1208, %v2580, 0.0
    %2591 = vadd.xlane.f32.xlu0 %v2590
    %v2592 = vpop.xlane.xlu0 %2591
    %v2593 = vrcp.pop %v2583
    %v2594 = vrcp.pop %v2586
    %v2595 = vrcp.pop %v2589
    %v2596 = vrcp.pop %v2592
    %v2597 = vmul.f32 %v2583, %v2593
    %v2598 = vmul.f32 %v2586, %v2594
    %v2599 = vmul.f32 %v2589, %v2595
    %v2600 = vmul.f32 %v2592, %v2596
    %v2601 = vsub.f32 2.0, %v2597
    %v2602 = vsub.f32 2.0, %v2598
    %v2603 = vsub.f32 2.0, %v2599
    %v2604 = vsub.f32 2.0, %v2600
    %v2605 = vmul.f32 %v2593, %v2601
    %v2606 = vmul.f32 %v2594, %v2602
    %v2607 = vmul.f32 %v2595, %v2603
    %v2608 = vmul.f32 %v2596, %v2604
    %v2609 = vmul.f32 %v2605, 0.5
    %v2610 = vmul.f32 %v2606, 0.5
    %v2611 = vmul.f32 %v2607, 0.5
    %v2612 = vmul.f32 %v2608, 0.5
    %v2613 = vmul.f32 %v2574, %v2609
    %v2614 = vmul.f32 %v2576, %v2610
    %v2615 = vmul.f32 %v2578, %v2611
    %v2616 = vmul.f32 %v2580, %v2612
    %v2618 = vsel %vm1208, %v2613, 0
    %v2621 = vsel %vm1208, %v2614, 0
    %v2624 = vsel %vm1208, %v2615, 0
    %v2627 = vsel %vm1208, %v2616, 0
    %2629 = vmatprep.subr.mxu0 0.0
    %2630 = vmatpush1.msra.mxu0 %v1523
    %2631 = vmatprep.subr.mxu0 0.0
    %2632 = vmatpush1.msra.mxu0 %v1529
    %2633 = vmatprep.subr.mxu0 0.0
    %2634 = vmatpush1.msra.mxu0 0.0
    %2635 = vmatprep.subr.mxu0 0.0
    %2636 = vmatpush1.msra.mxu0 0.0
    %2637 = vmatprep.subr.mxu0 0.0
    %2638 = vmatpush1.msra.mxu0 0.0
    %2639 = vmatprep.subr.mxu0 0.0
    %2640 = vmatpush1.msra.mxu0 0.0
    %2641 = vmatprep.subr.mxu0 0.0
    %2642 = vmatpush1.msra.mxu0 0.0
    %2643 = vmatprep.subr.mxu0 0.0
    %2644 = vmatpush1.msra.mxu0 0.0
    %2645 = vmatprep.subr.mxu0 0.0
    %2646 = vmatpush1.msra.mxu0 0.0
    %2647 = vmatprep.subr.mxu0 0.0
    %2648 = vmatpush1.msra.mxu0 0.0
    %2649 = vmatprep.subr.mxu0 0.0
    %2650 = vmatpush1.msra.mxu0 0.0
    %2651 = vmatprep.subr.mxu0 0.0
    %2652 = vmatpush1.msra.mxu0 0.0
    %2653 = vmatprep.subr.mxu0 0.0
    %2654 = vmatpush1.msra.mxu0 0.0
    %2655 = vmatprep.subr.mxu0 0.0
    %2656 = vmatpush1.msra.mxu0 0.0
    %2657 = vmatprep.subr.mxu0 0.0
    %2658 = vmatpush1.msra.mxu0 0.0
    %2659 = vmatprep.subr.mxu0 0.0
    %2660 = vmatpush1.msra.mxu0 0.0
    %2661 = vmatprep.subr.mxu0 0.0
    %2662 = vmatpush1.msra.mxu0 0.0
    %2663 = vmatprep.subr.mxu0 0.0
    %2664 = vmatpush1.msra.mxu0 0.0
    %2665 = vmatprep.subr.mxu0 0.0
    %2666 = vmatpush1.msra.mxu0 0.0
    %2667 = vmatprep.subr.mxu0 0.0
    %2668 = vmatpush1.msra.mxu0 0.0
    %2669 = vmatprep.subr.mxu0 0.0
    %2670 = vmatpush1.msra.mxu0 0.0
    %2671 = vmatprep.subr.mxu0 0.0
    %2672 = vmatpush1.msra.mxu0 0.0
    %2673 = vmatprep.subr.mxu0 0.0
    %2674 = vmatpush1.msra.mxu0 0.0
    %2675 = vmatprep.subr.mxu0 0.0
    %2676 = vmatpush1.msra.mxu0 0.0
    %2677 = vmatprep.subr.mxu0 0.0
    %2678 = vmatpush1.msra.mxu0 0.0
    %2679 = vmatprep.subr.mxu0 0.0
    %2680 = vmatpush1.msra.mxu0 0.0
    %2681 = vmatprep.subr.mxu0 0.0
    %2682 = vmatpush1.msra.mxu0 0.0
    %2683 = vmatprep.subr.mxu0 0.0
    %2684 = vmatpush1.msra.mxu0 0.0
    %2685 = vmatprep.subr.mxu0 0.0
    %2686 = vmatpush1.msra.mxu0 0.0
    %2687 = vmatprep.subr.mxu0 0.0
    %2688 = vmatpush1.msra.mxu0 0.0
    %2689 = vmatprep.subr.mxu0 0.0
    %2690 = vmatpush1.msra.mxu0 0.0
    %2691 = vmatprep.subr.mxu0 0.0
    %2692 = vmatpush1.msra.mxu0 0.0
    %2693 = vmatprep.mubr.f32.mxu0 0.0
    %2694 = vmatmul.mubr.f32.gmra.mrb[0].mxu0 %v2618
    %v2695 = vpop.f32.mrb[0].mxu0
    %v2696 = vadd.f32 0.0, %v2695
    %v2697 = vpop.f32.mrb[0].mxu0
    %2698 = vmatprep.mubr.f32.mxu0 0.0
    %2699 = vmatmul.mubr.f32.gmra.mrb[0].mxu0 %v2621
    %v2700 = vpop.f32.mrb[0].mxu0
    %v2701 = vadd.f32 0.0, %v2700
    %v2702 = vpop.f32.mrb[0].mxu0
    %2703 = vmatprep.mubr.f32.mxu0 0.0
    %2704 = vmatmul.mubr.f32.gmra.mrb[0].mxu0 %v2624
    %v2705 = vpop.f32.mrb[0].mxu0
    %v2706 = vadd.f32 0.0, %v2705
    %v2707 = vpop.f32.mrb[0].mxu0
    %2708 = vmatprep.mubr.f32.mxu0 0.0
    %2709 = vmatmul.mubr.f32.gmra.mrb[0].mxu0 %v2627
    %v2710 = vpop.f32.mrb[0].mxu0
    %v2711 = vadd.f32 0.0, %v2710
    %v2712 = vpop.f32.mrb[0].mxu0
    %2713 = vdwg.mxu0
    %2716 = vrot.lane.b32.xlu0 %v2706, 96
    %v2717 = vpop.permute.xlu0 %2716
    %2718 = vrot.lane.b32.xlu0 %v2711, 96
    %v2719 = vpop.permute.xlu0 %2718
    %v2722 = vadd.f32 %v2696, %v2717
    %v2723 = vadd.f32 %v2701, %v2719
    %v2724 = vlaneseq
    %v2725 = vshrl.u32 %v2724, 7
    %v2726 = vsub.s32 3, %v2725
    %v2727 = vrot.slane %v1402, %v2726
    %v2728 = vadd.f32 %v2722, %v2727
    %v2729 = vadd.f32 %v2723, %v2727
    %v2730 = vmul.f32 %v2728, 0.5
    %v2731 = vmul.f32 %v2729, 0.5
    %v2732 = vmul.f32 %v2728, 0.70710677
    %v2733 = vmul.f32 %v2729, 0.70710677
    %v2734 = verf.f32.pop %v2732
    %v2735 = verf.f32.pop %v2733
    %v2736 = vadd.f32 %v2734, 1.0
    %v2737 = vadd.f32 %v2735, 1.0
    %v2738 = vmul.f32 %v2730, %v2736
    %v2739 = vmul.f32 %v2731, %v2737
    %v2740 = vadd.f32 %v2738, %v1392
    %v2741 = vadd.f32 %v2739, %v1393
    %v2742 = vld [vmem:[#allocation2 + $0xa0] sm:$0xff]
    %v2743 = vld [vmem:[#allocation2 + $0xa8] sm:$0xff]
    %v2744 = vld [vmem:[#allocation2 + $0xb0] sm:$0xff]
    %v2745 = vld [vmem:[#allocation2 + $0xb8] sm:$0xff]
    %v2746 = vld [vmem:[#allocation2 + $0xc0] sm:$0xff]
    %v2747 = vld [vmem:[#allocation2 + $0xc8] sm:$0xff]
    %v2748 = vld [vmem:[#allocation2 + $0xd0] sm:$0xff]
    %v2749 = vld [vmem:[#allocation2 + $0xd8] sm:$0xff]
    %s2750 = scalar_lea.vmem [#allocation2], 224
    %v2751 = vld [vmem:[%s2750] ss:$8 sm:$0x3]
    %v2753 = vlaneseq
    %v2754 = vshrl.u32 %v2753, 7
    %v2755 = vsub.s32 0, %v2754
    %v2756 = vrot.slane %v2751, %v2755
    %v2759 = vsel %vm42, %v2740, 0
    %v2762 = vsel %vm42, %v2741, 0
    %2764 = vmatprep.subr.mxu0 %v2743
    %2765 = vmatpush1.msra.mxu0 %v2742
    %2766 = vmatprep.subr.mxu0 %v2745
    %2767 = vmatpush1.msra.mxu0 %v2744
    %2768 = vmatprep.subr.mxu0 %v2747
    %2769 = vmatpush1.msra.mxu0 %v2746
    %2770 = vmatprep.subr.mxu0 %v2749
    %2771 = vmatpush1.msra.mxu0 %v2748
    %2772 = vmatprep.subr.mxu0 0.0
    %2773 = vmatpush1.msra.mxu0 0.0
    %2774 = vmatprep.subr.mxu0 0.0
    %2775 = vmatpush1.msra.mxu0 0.0
    %2776 = vmatprep.subr.mxu0 0.0
    %2777 = vmatpush1.msra.mxu0 0.0
    %2778 = vmatprep.subr.mxu0 0.0
    %2779 = vmatpush1.msra.mxu0 0.0
    %2780 = vmatprep.subr.mxu0 0.0
    %2781 = vmatpush1.msra.mxu0 0.0
    %2782 = vmatprep.subr.mxu0 0.0
    %2783 = vmatpush1.msra.mxu0 0.0
    %2784 = vmatprep.subr.mxu0 0.0
    %2785 = vmatpush1.msra.mxu0 0.0
    %2786 = vmatprep.subr.mxu0 0.0
    %2787 = vmatpush1.msra.mxu0 0.0
    %2788 = vmatprep.subr.mxu0 0.0
    %2789 = vmatpush1.msra.mxu0 0.0
    %2790 = vmatprep.subr.mxu0 0.0
    %2791 = vmatpush1.msra.mxu0 0.0
    %2792 = vmatprep.subr.mxu0 0.0
    %2793 = vmatpush1.msra.mxu0 0.0
    %2794 = vmatprep.subr.mxu0 0.0
    %2795 = vmatpush1.msra.mxu0 0.0
    %2796 = vmatprep.subr.mxu0 0.0
    %2797 = vmatpush1.msra.mxu0 0.0
    %2798 = vmatprep.subr.mxu0 0.0
    %2799 = vmatpush1.msra.mxu0 0.0
    %2800 = vmatprep.subr.mxu0 0.0
    %2801 = vmatpush1.msra.mxu0 0.0
    %2802 = vmatprep.subr.mxu0 0.0
    %2803 = vmatpush1.msra.mxu0 0.0
    %2804 = vmatprep.subr.mxu0 0.0
    %2805 = vmatpush1.msra.mxu0 0.0
    %2806 = vmatprep.subr.mxu0 0.0
    %2807 = vmatpush1.msra.mxu0 0.0
    %2808 = vmatprep.subr.mxu0 0.0
    %2809 = vmatpush1.msra.mxu0 0.0
    %2810 = vmatprep.subr.mxu0 0.0
    %2811 = vmatpush1.msra.mxu0 0.0
    %2812 = vmatprep.subr.mxu0 0.0
    %2813 = vmatpush1.msra.mxu0 0.0
    %2814 = vmatprep.subr.mxu0 0.0
    %2815 = vmatpush1.msra.mxu0 0.0
    %2816 = vmatprep.subr.mxu0 0.0
    %2817 = vmatpush1.msra.mxu0 0.0
    %2818 = vmatprep.subr.mxu0 0.0
    %2819 = vmatpush1.msra.mxu0 0.0
    %2820 = vmatprep.subr.mxu0 0.0
    %2821 = vmatpush1.msra.mxu0 0.0
    %2822 = vmatprep.subr.mxu0 0.0
    %2823 = vmatpush1.msra.mxu0 0.0
    %2824 = vmatprep.subr.mxu0 0.0
    %2825 = vmatpush1.msra.mxu0 0.0
    %2826 = vmatprep.subr.mxu0 0.0
    %2827 = vmatpush1.msra.mxu0 0.0
    %2828 = vmatprep.mubr.f32.mxu0 0.0
    %2829 = vmatmul.mubr.f32.gmra.mrb[0].mxu0 %v2759
    %v2830 = vpop.f32.mrb[0].mxu0
    %v2831 = vadd.f32 %v2756, %v2830
    %v2832 = vpop.f32.mrb[0].mxu0
    %2833 = vmatprep.mubr.f32.mxu0 0.0
    %2834 = vmatmul.mubr.f32.gmra.mrb[0].mxu0 %v2762
    %v2835 = vpop.f32.mrb[0].mxu0
    %v2836 = vadd.f32 %v2756, %v2835
    %v2837 = vpop.f32.mrb[0].mxu0
    %2838 = vdwg.mxu0
    %2839 = vst.msk [vmem:[#allocation5] sm:$0xff] %vm42, %v2831
    %2840 = vst.msk [vmem:[#allocation5 + $0x8] sm:$0xff] %vm42, %v2836
    // Predicated region
    $region14: #{tpu_custom_call.1} parent=1 // pred_check
      _
    $region15: #{tpu_custom_call.1} parent=1 // pred_check_branch
      %2842 = sbr.rel (0) target = $region17
    $region16: #{tpu_custom_call.1} parent=1 // pred_region
      %s2844 = ssub.s32 256, 256
      %2845 = vsyncadd [#allocation4], %s2844
      %s2846 = sshll.u32 [#allocation5], 4
      %s2847 = int_to_ptr.vmem [resolvable:$true] %s2846
      %2852 = dma.vmem_to_hbm [thread:$0]  %s2847, 256, %s2, [#allocation4], 128, 128, 8
    $region17: #{tpu_custom_call.1} parent=1 // pred_fallthru
      _
    // Predicated region
    $region18: #{tpu_custom_call.1} parent=1 // pred_check
      _
    $region19: #{tpu_custom_call.1} parent=1 // pred_check_branch
      %2854 = sbr.rel (0) target = $region21
    $region20: #{tpu_custom_call.1} parent=1 // pred_region
      %2855 = dma.done [#allocation4], 256
    $region21: #{tpu_custom_call.1} parent=1 // pred_fallthru
      _
    %2856 = vsyncpa [#allocation3], 1
    %2857 = vsyncpa [#allocation4], 1

</llo_original>
